<compile_context>
chip_gen: v7x
topology: tpu7x:2x2x1
jax: 0.10.0
libtpu: 0.0.40
codegen_flags: <defaults>
</compile_context>

<pallas_src>
import jax
import jax.numpy as jnp
from jax.experimental import pallas as pl
from jax.experimental.pallas import tpu as pltpu

# Matmul-operand dtype.  bf16 hits the fast MXU path on v5e/v6e/v7x and halves weight /
# context-product DMA & VMEM.  Norms, qq/kk, softmax and residuals remain f32.
MXU_DTYPE = jnp.bfloat16


def _cdiv(a, b):
    return -(-a // b)


def _round_up(a, b):
    return _cdiv(a, b) * b


def _l2_normalize(t, axis=-1, eps=1e-12):
    # matches torch.nn.functional.normalize(p=2, eps=1e-12)
    n = jnp.sqrt(jnp.sum(t * t, axis=axis, keepdims=True))
    return t / jnp.maximum(n, eps)


def _vmem_capacity_bytes():
    try:
        return int(pltpu.get_tpu_info().vmem_capacity_bytes)
    except Exception:
        return 64 << 20  # conservative (v7x per-TC VMEM)


def _pick_tile_n(n, vmem_cap):
    """Generation-aware spatial tile: 1024 rows on 128-MiB-VMEM chips (v5e/v6e), 512 on v7x."""
    target = 1024 if vmem_cap >= (96 << 20) else 512
    if jnp.dtype(MXU_DTYPE).itemsize >= 4:
        target //= 2
    return min(target, _round_up(n, 8))


def _vmem_limit_bytes(tile_n, C, Di, F, heads, s_pad, dh, cap):
    """Explicit scoped-VMEM limit from actual tile/weight/scratch sizes + ~25% headroom."""
    bpe = jnp.dtype(MXU_DTYPE).itemsize
    io = 2 * 2 * tile_n * C * 4                                     # dbl-buffered in/out f32 tiles
    weights = 2 * ((C * Di + C * F + F * C) * bpe + (F + 4 * C) * 4)
    ctx = 2 * ((heads * dh * s_pad + heads * s_pad * C) * bpe + heads * s_pad * 4)
    scratch = tile_n * heads * s_pad * bpe
    live = tile_n * (F + 2 * heads * s_pad + Di + 4 * C) * 4        # h1 / sim / q / temporaries
    est = int(1.25 * (io + weights + ctx + scratch + live))
    return int(min(0.9 * cap, max(est, 32 << 20)))


def _context_precompute(context, params, *, heads, dim_head, s_pad):
    """Per-batch context branch, done once outside the kernel (cheap O(S*Dc*Di) XLA work).

    Returns:
      kT_pad : (B, heads, dh, s_pad) MXU_DTYPE — per-head K^T, zero-padded columns.
      kk_pad : (B, heads, 1, s_pad)  f32       — per-head ||k||^2 rows, +1e30 in padding so
                                                 padded columns get softmax probability 0.
      vo_pad : (B, heads*s_pad, C)   MXU_DTYPE — per-head V @ Wo_h stacked, zero padded rows.
    """
    B, S, Dc = context.shape
    ctx_n = _l2_normalize(context) * (Dc ** 0.5) * params["gamma_ctx"].reshape(1, 1, Dc)
    k = jnp.einsum("bsd,de->bse", ctx_n, params["wk"])       # (B, S, Di)
    v = jnp.einsum("bsd,de->bse", ctx_n, params["wv"])
    kh = k.reshape(B, S, heads, dim_head)
    vh = v.reshape(B, S, heads, dim_head)

    kT = jnp.transpose(kh, (0, 2, 3, 1))                     # (B, h, dh, S)
    kT_pad = jnp.pad(kT, ((0, 0), (0, 0), (0, 0), (0, s_pad - S)))

    kk = jnp.transpose(jnp.sum(kh * kh, axis=-1), (0, 2, 1))[:, :, None, :]  # (B, h, 1, S)
    kk_pad = jnp.pad(kk, ((0, 0), (0, 0), (0, 0), (0, s_pad - S)), constant_values=1e30)

    # fold output projection into V:  (attn @ v_h) @ Wo_h == attn @ (v_h @ Wo_h)
    wo_h = params["wo"].reshape(heads, dim_head, -1)          # (h, dh, C)
    vo = jnp.einsum("bshd,hdc->bhsc", vh, wo_h)               # (B, h, S, C)
    vo_pad = jnp.pad(vo, ((0, 0), (0, 0), (0, s_pad - S), (0, 0)))
    vo_pad = vo_pad.reshape(B, heads * s_pad, -1)

    return (kT_pad.astype(MXU_DTYPE),
            kk_pad.astype(jnp.float32),
            vo_pad.astype(MXU_DTYPE))


def make_block_kernel(dim, dim_head, heads, s_pad):
    scale_attn = dim_head ** -0.5
    scale_fmap = dim ** 0.5

    def kernel(x_ref, gamma_f_ref, wq_ref, kT_ref, kk_ref, vo_ref,
               gamma_ff_ref, w1_ref, b1_ref, w2_ref, b2_ref,
               out_ref, p_scr):
        # ---------------- CrossAttention (per spatial tile) ----------------
        x = x_ref[...]                                               # (T, C) f32
        fmap_n = _l2_normalize(x) * scale_fmap * gamma_f_ref[...]    # ChannelRMSNorm
        q = jnp.dot(fmap_n.astype(MXU_DTYPE), wq_ref[...],
                    preferred_element_type=jnp.float32)              # (T, Di) f32

        # Per-head scores -> softmax probs written into one lane-aligned scratch slab so
        # attn @ (V @ Wo) becomes a single matmul with contraction K = heads*s_pad.
        # Static unroll: no loop-carried accumulator, vreg live ranges end at the scratch
        # store (switch to lax.fori_loop with pl.ds/pl.multiple_of for heads >= ~4).
        for h in range(heads):
            sl = slice(h * dim_head, (h + 1) * dim_head)
            qh = q[:, sl]                                            # (T, dh) f32
            qq = jnp.sum(qh * qh, axis=-1, keepdims=True)            # (T, 1)  f32
            s = jnp.dot(qh.astype(MXU_DTYPE), kT_ref[h],
                        preferred_element_type=jnp.float32)          # (T, s_pad)
            d2 = qq + kk_ref[h] - 2.0 * s     # padded columns carry +1e30 -> prob 0
            sim = -jnp.sqrt(jnp.maximum(d2, 0.0)) * scale_attn       # -cdist * scale
            # TODO(synk): optional `mask` argument not plumbed through (mask=None path only)
            sim = sim - jnp.max(sim, axis=-1, keepdims=True)
            e = jnp.exp(sim)
            r = pl.reciprocal(jnp.sum(e, axis=-1, keepdims=True), approx=True)  # EUP
            p_scr[:, h * s_pad:(h + 1) * s_pad] = (e * r).astype(MXU_DTYPE)

        attn_out = jnp.dot(p_scr[...], vo_ref[...],
                           preferred_element_type=jnp.float32)       # (T, C)
        y = attn_out + x                                             # residual 1

        # ---------------- FeedForward (channel_first) ----------------
        y_n = _l2_normalize(y) * scale_fmap * gamma_ff_ref[...]
        h1 = jnp.dot(y_n.astype(MXU_DTYPE), w1_ref[...],
                     preferred_element_type=jnp.float32) + b1_ref[...]
        h1 = jax.nn.gelu(h1, approximate=True)   # tanh GELU -> EUP slot (VALU relief, esp. v5e)
        ff = jnp.dot(h1.astype(MXU_DTYPE), w2_ref[...],
                     preferred_element_type=jnp.float32) + b2_ref[...]

        out_ref[...] = (ff + y).astype(out_ref.dtype)                # residual 2

    return kernel


def cross_attention_block(x_nchw, context, params, *, dim_head, heads, tile_n=None):
    B, C, H, W = x_nchw.shape
    _, S, Dc = context.shape
    N = H * W
    dim_inner = dim_head * heads
    ff_hidden = params["w1"].shape[1]
    s_pad = 128 * _cdiv(S, 128)

    vmem_cap = _vmem_capacity_bytes()
    if tile_n is None:
        tile_n = _pick_tile_n(N, vmem_cap)
    assert tile_n % 8 == 0, tile_n

    n_tiles = _cdiv(N, tile_n)
    n_pad = n_tiles * tile_n
    grid = (B, n_tiles)

    # NCHW -> channels-last (B, N, C); pad N up to a tile multiple (zero rows are inert).
    # TODO(synk): in production keep the block's I/O channels-last end-to-end (or fuse the
    # layout change into neighbouring ops) — the NCHW module interface forces transposes here.
    x_flat = jnp.transpose(x_nchw, (0, 2, 3, 1)).reshape(B, N, C)
    if n_pad != N:
        x_flat = jnp.pad(x_flat, ((0, 0), (0, n_pad - N), (0, 0)))

    # Context branch precomputed once per batch outside the kernel (kills the tile-0 bubble
    # and the scratch carry -> both grid axes can be "parallel").
    kT_pad, kk_pad, vo_pad = _context_precompute(
        context, params, heads=heads, dim_head=dim_head, s_pad=s_pad)

    kernel = make_block_kernel(C, dim_head, heads, s_pad)

    def const_spec(shape):
        zeros = (0,) * len(shape)
        return pl.BlockSpec(shape, lambda b, n: zeros)

    in_specs = [
        pl.BlockSpec((None, tile_n, C), lambda b, n: (b, n, 0)),                  # fmap tile
        const_spec((1, C)),                                                       # gamma_fmap
        const_spec((C, dim_inner)),                                               # Wq
        pl.BlockSpec((None, heads, dim_head, s_pad), lambda b, n: (b, 0, 0, 0)),  # K^T (padded)
        pl.BlockSpec((None, heads, 1, s_pad), lambda b, n: (b, 0, 0, 0)),         # ||k||^2 rows
        pl.BlockSpec((None, heads * s_pad, C), lambda b, n: (b, 0, 0)),           # V @ Wo
        const_spec((1, C)),                                                       # gamma_ff
        const_spec((C, ff_hidden)),                                               # W1
        const_spec((1, ff_hidden)),                                               # b1
        const_spec((ff_hidden, C)),                                               # W2
        const_spec((1, C)),                                                       # b2
    ]

    vmem_limit = _vmem_limit_bytes(tile_n, C, dim_inner, ff_hidden, heads, s_pad,
                                   dim_head, vmem_cap)

    bpe = jnp.dtype(MXU_DTYPE).itemsize
    flops = int(2 * B * n_pad * C * dim_inner               # q projection
                + 2 * B * n_pad * heads * dim_head * s_pad  # per-head scores
                + 2 * B * n_pad * heads * s_pad * C         # fused attn @ (V @ Wo)
                + 4 * B * n_pad * C * ff_hidden)            # feed-forward
    transcendentals = int(B * n_pad * (heads * s_pad + ff_hidden + 3))
    bytes_accessed = int(4 * 2 * B * n_pad * C
                         + bpe * (C * dim_inner + 2 * C * ff_hidden
                                  + B * heads * s_pad * (dim_head + C))
                         + 4 * (B * heads * s_pad + ff_hidden + 4 * C))

    out = pl.pallas_call(
        kernel,
        out_shape=jax.ShapeDtypeStruct((B, n_pad, C), jnp.float32),
        grid=grid,
        in_specs=in_specs,
        out_specs=pl.BlockSpec((None, tile_n, C), lambda b, n: (b, n, 0)),
        scratch_shapes=[pltpu.VMEM((tile_n, heads * s_pad), MXU_DTYPE)],  # prob slab
        compiler_params=pltpu.CompilerParams(
            dimension_semantics=("parallel", "parallel"),
            vmem_limit_bytes=vmem_limit),
        cost_estimate=pl.CostEstimate(flops=flops,
                                      transcendentals=transcendentals,
                                      bytes_accessed=bytes_accessed),
    )(x_flat,
      params["gamma_fmap"], params["wq"].astype(MXU_DTYPE),
      kT_pad, kk_pad, vo_pad,
      params["gamma_ff"],
      params["w1"].astype(MXU_DTYPE), params["b1"],
      params["w2"].astype(MXU_DTYPE), params["b2"])

    out = out[:, :N, :]
    return jnp.transpose(out.reshape(B, H, W, C), (0, 3, 1, 2))


def reference(x_nchw, context, params, *, dim_head, heads):
    """Pure-JAX f32 reference matching the PyTorch module math (for verification)."""
    B, C, H, W = x_nchw.shape
    _, S, Dc = context.shape
    N = H * W
    x = jnp.transpose(x_nchw, (0, 2, 3, 1)).reshape(B, N, C)

    fmap_n = _l2_normalize(x) * (C ** 0.5) * params["gamma_fmap"][0]
    ctx_n = _l2_normalize(context) * (Dc ** 0.5) * params["gamma_ctx"][0]

    q = fmap_n @ params["wq"]
    k = ctx_n @ params["wk"]
    v = ctx_n @ params["wv"]

    def split(t):  # (B, L, h*d) -> (B, h, L, d)
        return t.reshape(t.shape[0], t.shape[1], heads, dim_head).transpose(0, 2, 1, 3)

    qh, kh, vh = split(q), split(k), split(v)
    qq = jnp.sum(qh * qh, -1, keepdims=True)
    kk = jnp.sum(kh * kh, -1, keepdims=True)
    d2 = qq + jnp.swapaxes(kk, -1, -2) - 2.0 * jnp.einsum("bhid,bhjd->bhij", qh, kh)
    sim = -jnp.sqrt(jnp.maximum(d2, 0.0)) * (dim_head ** -0.5)
    attn = jax.nn.softmax(sim, axis=-1)
    o = jnp.einsum("bhij,bhjd->bhid", attn, vh)
    o = o.transpose(0, 2, 1, 3).reshape(B, N, heads * dim_head)
    y = o @ params["wo"] + x

    y_n = _l2_normalize(y) * (C ** 0.5) * params["gamma_ff"][0]
    h1 = jax.nn.gelu(y_n @ params["w1"] + params["b1"][0], approximate=False)
    out = h1 @ params["w2"] + params["b2"][0] + y
    return jnp.transpose(out.reshape(B, H, W, C), (0, 3, 1, 2))


if __name__ == "__main__":
    # Small shapes: batch=2, dim=8, spatial=16x16 (N=256 -> 4 tiles of 64), context dim=12,
    # seq=8 (padded to 128 lanes), heads=2, dim_head=16 (dim_inner=32), ff hidden=32.
    B, C, H, W = 2, 8, 16, 16
    S, Dc = 8, 12
    heads, dim_head = 2, 16
    dim_inner = heads * dim_head
    ff_hidden = C * 4

    key = jax.random.PRNGKey(0)
    ks = jax.random.split(key, 9)

    x = jax.random.normal(ks[0], (B, C, H, W), jnp.float32)
    context = jax.random.normal(ks[1], (B, S, Dc), jnp.float32)

    params = {
        "gamma_fmap": jnp.ones((1, C), jnp.float32),   # ChannelRMSNorm.gamma (init = ones)
        "gamma_ctx": jnp.ones((1, Dc), jnp.float32),   # RMSNorm.gamma
        "wq": 0.1 * jax.random.normal(ks[2], (C, dim_inner), jnp.float32),
        "wk": 0.1 * jax.random.normal(ks[3], (Dc, dim_inner), jnp.float32),
        "wv": 0.1 * jax.random.normal(ks[4], (Dc, dim_inner), jnp.float32),
        "wo": 0.1 * jax.random.normal(ks[5], (dim_inner, C), jnp.float32),
        "gamma_ff": jnp.ones((1, C), jnp.float32),     # FeedForward ChannelRMSNorm.gamma
        "w1": 0.1 * jax.random.normal(ks[6], (C, ff_hidden), jnp.float32),
        "b1": 0.01 * jax.random.normal(ks[7], (1, ff_hidden), jnp.float32),
        "w2": 0.1 * jax.random.normal(ks[8], (ff_hidden, C), jnp.float32),
        "b2": jnp.zeros((1, C), jnp.float32),
    }

    # tile_n=64 exercises the multi-tile path: grid = (2 batches, 4 spatial tiles).
    out = cross_attention_block(x, context, params, dim_head=dim_head, heads=heads, tile_n=64)
    out = jax.block_until_ready(out)

    ref = reference(x, context, params, dim_head=dim_head, heads=heads)
    assert out.shape == (B, C, H, W)
    # Tolerance covers bf16 MXU operands, approximate EUP reciprocal and tanh GELU.
    assert jnp.allclose(out, ref, rtol=4e-2, atol=4e-2), "mismatch vs JAX reference"

    print("KERNEL_OK")
</pallas_src>

<mosaic_0001>
module attributes {stable_mosaic.version = 11 : i64} {
  func.func @kernel(%arg0: i32, %arg1: i32, %arg2: memref<1x64x8xf32, #tpu.memory_space<vmem>>, %arg3: memref<1x8xf32, #tpu.memory_space<vmem>>, %arg4: memref<8x32xbf16, #tpu.memory_space<vmem>>, %arg5: memref<1x2x16x128xbf16, #tpu.memory_space<vmem>>, %arg6: memref<1x2x1x128xf32, #tpu.memory_space<vmem>>, %arg7: memref<1x256x8xbf16, #tpu.memory_space<vmem>>, %arg8: memref<1x8xf32, #tpu.memory_space<vmem>>, %arg9: memref<8x32xbf16, #tpu.memory_space<vmem>>, %arg10: memref<1x32xf32, #tpu.memory_space<vmem>>, %arg11: memref<32x8xbf16, #tpu.memory_space<vmem>>, %arg12: memref<1x8xf32, #tpu.memory_space<vmem>>, %arg13: memref<1x64x8xf32, #tpu.memory_space<vmem>>, %arg14: memref<64x256xbf16, #tpu.memory_space<vmem>>) attributes {dimension_semantics = [#tpu.dimension_semantics<parallel>, #tpu.dimension_semantics<parallel>], iteration_bounds = array<i64: 2, 4>, scalar_prefetch = 0 : i64, scratch_operands = 1 : i64, tpu.core_type = #tpu.core_type<tc>, window_params = [{transform_indices = @transform_0, window_bounds = array<i64: 1, 64, 8>}, {pipeline_mode = #tpu.pipeline_mode<synchronous>, transform_indices = @transform_1, window_bounds = array<i64: 1, 8>}, {pipeline_mode = #tpu.pipeline_mode<synchronous>, transform_indices = @transform_2, window_bounds = array<i64: 8, 32>}, {transform_indices = @transform_3, window_bounds = array<i64: 1, 2, 16, 128>}, {transform_indices = @transform_4, window_bounds = array<i64: 1, 2, 1, 128>}, {transform_indices = @transform_5, window_bounds = array<i64: 1, 256, 8>}, {pipeline_mode = #tpu.pipeline_mode<synchronous>, transform_indices = @transform_6, window_bounds = array<i64: 1, 8>}, {pipeline_mode = #tpu.pipeline_mode<synchronous>, transform_indices = @transform_7, window_bounds = array<i64: 8, 32>}, {pipeline_mode = #tpu.pipeline_mode<synchronous>, transform_indices = @transform_8, window_bounds = array<i64: 1, 32>}, {pipeline_mode = #tpu.pipeline_mode<synchronous>, transform_indices = @transform_9, window_bounds = array<i64: 32, 8>}, {pipeline_mode = #tpu.pipeline_mode<synchronous>, transform_indices = @transform_10, window_bounds = array<i64: 1, 8>}, {transform_indices = @transform_11, window_bounds = array<i64: 1, 64, 8>}]} {
    %c0 = arith.constant 0 : index
    %c0_0 = arith.constant 0 : index
    %c0_1 = arith.constant 0 : index
    %0 = vector.load %arg2[%c0, %c0_0, %c0_1] : memref<1x64x8xf32, #tpu.memory_space<vmem>>, vector<1x64x8xf32>
    %1 = vector.shape_cast %0 : vector<1x64x8xf32> to vector<64x8xf32>
    %2 = arith.mulf %1, %1 : vector<64x8xf32>
    %cst = arith.constant dense<0.000000e+00> : vector<64xf32>
    %3 = vector.multi_reduction <add>, %2, %cst [1] : vector<64x8xf32> to vector<64xf32>
    %4 = vector.shape_cast %3 : vector<64xf32> to vector<64x1xf32>
    %5 = math.sqrt %4 : vector<64x1xf32>
    %cst_2 = arith.constant 9.99999996E-13 : f32
    %6 = vector.broadcast %cst_2 : f32 to vector<64x1xf32>
    %7 = arith.maximumf %5, %6 : vector<64x1xf32>
    %8 = vector.broadcast %7 : vector<64x1xf32> to vector<64x8xf32>
    %9 = arith.divf %1, %8 : vector<64x8xf32>
    %cst_3 = arith.constant 2.82842708 : f32
    %10 = vector.broadcast %cst_3 : f32 to vector<64x8xf32>
    %11 = arith.mulf %9, %10 : vector<64x8xf32>
    %c0_4 = arith.constant 0 : index
    %c0_5 = arith.constant 0 : index
    %12 = vector.load %arg3[%c0_4, %c0_5] : memref<1x8xf32, #tpu.memory_space<vmem>>, vector<1x8xf32>
    %13 = vector.broadcast %12 : vector<1x8xf32> to vector<64x8xf32>
    %14 = arith.mulf %11, %13 : vector<64x8xf32>
    %15 = arith.truncf %14 : vector<64x8xf32> to vector<64x8xbf16>
    %c0_6 = arith.constant 0 : index
    %c0_7 = arith.constant 0 : index
    %16 = vector.load %arg4[%c0_6, %c0_7] : memref<8x32xbf16, #tpu.memory_space<vmem>>, vector<8x32xbf16>
    %cst_8 = arith.constant dense<0.000000e+00> : vector<64x32xf32>
    %17 = tpu.matmul %15, %16, %cst_8 {dimension_numbers = #tpu.dot_dimension_numbers<[1], [0], [0], [1], [0, 0, 1, 1], [], []>} : vector<64x8xbf16>, vector<8x32xbf16>, vector<64x32xf32> -> vector<64x32xf32>
    %18 = vector.extract_strided_slice %17 {offsets = [0, 0], sizes = [64, 16], strides = [1, 1]} : vector<64x32xf32> to vector<64x16xf32>
    %19 = arith.mulf %18, %18 : vector<64x16xf32>
    %cst_9 = arith.constant dense<0.000000e+00> : vector<64xf32>
    %20 = vector.multi_reduction <add>, %19, %cst_9 [1] : vector<64x16xf32> to vector<64xf32>
    %21 = vector.shape_cast %20 : vector<64xf32> to vector<64x1xf32>
    %22 = arith.truncf %18 : vector<64x16xf32> to vector<64x16xbf16>
    %c0_10 = arith.constant 0 : index
    %c0_11 = arith.constant 0 : index
    %c0_12 = arith.constant 0 : index
    %c0_13 = arith.constant 0 : index
    %23 = vector.load %arg5[%c0_10, %c0_11, %c0_12, %c0_13] : memref<1x2x16x128xbf16, #tpu.memory_space<vmem>>, vector<1x1x16x128xbf16>
    %24 = vector.shape_cast %23 : vector<1x1x16x128xbf16> to vector<16x128xbf16>
    %cst_14 = arith.constant dense<0.000000e+00> : vector<64x128xf32>
    %25 = tpu.matmul %22, %24, %cst_14 {dimension_numbers = #tpu.dot_dimension_numbers<[1], [0], [0], [1], [0, 0, 1, 1], [], []>} : vector<64x16xbf16>, vector<16x128xbf16>, vector<64x128xf32> -> vector<64x128xf32>
    %c0_15 = arith.constant 0 : index
    %c0_16 = arith.constant 0 : index
    %c0_17 = arith.constant 0 : index
    %c0_18 = arith.constant 0 : index
    %26 = vector.load %arg6[%c0_15, %c0_16, %c0_17, %c0_18] : memref<1x2x1x128xf32, #tpu.memory_space<vmem>>, vector<1x1x1x128xf32>
    %27 = vector.shape_cast %26 : vector<1x1x1x128xf32> to vector<1x128xf32>
    %28 = vector.broadcast %21 : vector<64x1xf32> to vector<64x128xf32>
    %29 = vector.broadcast %27 : vector<1x128xf32> to vector<64x128xf32>
    %30 = arith.addf %28, %29 : vector<64x128xf32>
    %cst_19 = arith.constant 2.000000e+00 : f32
    %31 = vector.broadcast %cst_19 : f32 to vector<64x128xf32>
    %32 = arith.mulf %31, %25 : vector<64x128xf32>
    %33 = arith.subf %30, %32 : vector<64x128xf32>
    %cst_20 = arith.constant 0.000000e+00 : f32
    %34 = vector.broadcast %cst_20 : f32 to vector<64x128xf32>
    %35 = arith.maximumf %33, %34 : vector<64x128xf32>
    %36 = math.sqrt %35 : vector<64x128xf32>
    %cst_21 = arith.constant 0.000000e+00 : f32
    %37 = vector.broadcast %cst_21 : f32 to vector<64x128xf32>
    %38 = arith.subf %37, %36 : vector<64x128xf32>
    %cst_22 = arith.constant 2.500000e-01 : f32
    %39 = vector.broadcast %cst_22 : f32 to vector<64x128xf32>
    %40 = arith.mulf %38, %39 : vector<64x128xf32>
    %cst_23 = arith.constant dense<0xFF800000> : vector<64xf32>
    %41 = vector.multi_reduction <maximumf>, %40, %cst_23 [1] : vector<64x128xf32> to vector<64xf32>
    %42 = vector.shape_cast %41 : vector<64xf32> to vector<64x1xf32>
    %43 = vector.broadcast %42 : vector<64x1xf32> to vector<64x128xf32>
    %44 = arith.subf %40, %43 : vector<64x128xf32>
    %45 = math.exp %44 : vector<64x128xf32>
    %cst_24 = arith.constant dense<0.000000e+00> : vector<64xf32>
    %46 = vector.multi_reduction <add>, %45, %cst_24 [1] : vector<64x128xf32> to vector<64xf32>
    %47 = vector.shape_cast %46 : vector<64xf32> to vector<64x1xf32>
    %48 = tpu.reciprocal %47 {approx = true} : vector<64x1xf32> -> vector<64x1xf32>
    %49 = vector.broadcast %48 : vector<64x1xf32> to vector<64x128xf32>
    %50 = arith.mulf %45, %49 : vector<64x128xf32>
    %51 = arith.truncf %50 : vector<64x128xf32> to vector<64x128xbf16>
    %c0_25 = arith.constant 0 : index
    %c0_26 = arith.constant 0 : index
    %52 = vector.load %arg14[%c0_25, %c0_26] : memref<64x256xbf16, #tpu.memory_space<vmem>>, vector<64x128xbf16>
    tpu.vector_store %arg14[%c0_25, %c0_26], %51 {strides = array<i32>} : memref<64x256xbf16, #tpu.memory_space<vmem>>, vector<64x128xbf16>,
    %53 = vector.extract_strided_slice %17 {offsets = [0, 16], sizes = [64, 16], strides = [1, 1]} : vector<64x32xf32> to vector<64x16xf32>
    %54 = arith.mulf %53, %53 : vector<64x16xf32>
    %cst_27 = arith.constant dense<0.000000e+00> : vector<64xf32>
    %55 = vector.multi_reduction <add>, %54, %cst_27 [1] : vector<64x16xf32> to vector<64xf32>
    %56 = vector.shape_cast %55 : vector<64xf32> to vector<64x1xf32>
    %57 = arith.truncf %53 : vector<64x16xf32> to vector<64x16xbf16>
    %c0_28 = arith.constant 0 : index
    %c1 = arith.constant 1 : index
    %c0_29 = arith.constant 0 : index
    %c0_30 = arith.constant 0 : index
    %58 = vector.load %arg5[%c0_28, %c1, %c0_29, %c0_30] : memref<1x2x16x128xbf16, #tpu.memory_space<vmem>>, vector<1x1x16x128xbf16>
    %59 = vector.shape_cast %58 : vector<1x1x16x128xbf16> to vector<16x128xbf16>
    %cst_31 = arith.constant dense<0.000000e+00> : vector<64x128xf32>
    %60 = tpu.matmul %57, %59, %cst_31 {dimension_numbers = #tpu.dot_dimension_numbers<[1], [0], [0], [1], [0, 0, 1, 1], [], []>} : vector<64x16xbf16>, vector<16x128xbf16>, vector<64x128xf32> -> vector<64x128xf32>
    %c0_32 = arith.constant 0 : index
    %c1_33 = arith.constant 1 : index
    %c0_34 = arith.constant 0 : index
    %c0_35 = arith.constant 0 : index
    %61 = vector.load %arg6[%c0_32, %c1_33, %c0_34, %c0_35] : memref<1x2x1x128xf32, #tpu.memory_space<vmem>>, vector<1x1x1x128xf32>
    %62 = vector.shape_cast %61 : vector<1x1x1x128xf32> to vector<1x128xf32>
    %63 = vector.broadcast %56 : vector<64x1xf32> to vector<64x128xf32>
    %64 = vector.broadcast %62 : vector<1x128xf32> to vector<64x128xf32>
    %65 = arith.addf %63, %64 : vector<64x128xf32>
    %cst_36 = arith.constant 2.000000e+00 : f32
    %66 = vector.broadcast %cst_36 : f32 to vector<64x128xf32>
    %67 = arith.mulf %66, %60 : vector<64x128xf32>
    %68 = arith.subf %65, %67 : vector<64x128xf32>
    %cst_37 = arith.constant 0.000000e+00 : f32
    %69 = vector.broadcast %cst_37 : f32 to vector<64x128xf32>
    %70 = arith.maximumf %68, %69 : vector<64x128xf32>
    %71 = math.sqrt %70 : vector<64x128xf32>
    %cst_38 = arith.constant 0.000000e+00 : f32
    %72 = vector.broadcast %cst_38 : f32 to vector<64x128xf32>
    %73 = arith.subf %72, %71 : vector<64x128xf32>
    %cst_39 = arith.constant 2.500000e-01 : f32
    %74 = vector.broadcast %cst_39 : f32 to vector<64x128xf32>
    %75 = arith.mulf %73, %74 : vector<64x128xf32>
    %cst_40 = arith.constant dense<0xFF800000> : vector<64xf32>
    %76 = vector.multi_reduction <maximumf>, %75, %cst_40 [1] : vector<64x128xf32> to vector<64xf32>
    %77 = vector.shape_cast %76 : vector<64xf32> to vector<64x1xf32>
    %78 = vector.broadcast %77 : vector<64x1xf32> to vector<64x128xf32>
    %79 = arith.subf %75, %78 : vector<64x128xf32>
    %80 = math.exp %79 : vector<64x128xf32>
    %cst_41 = arith.constant dense<0.000000e+00> : vector<64xf32>
    %81 = vector.multi_reduction <add>, %80, %cst_41 [1] : vector<64x128xf32> to vector<64xf32>
    %82 = vector.shape_cast %81 : vector<64xf32> to vector<64x1xf32>
    %83 = tpu.reciprocal %82 {approx = true} : vector<64x1xf32> -> vector<64x1xf32>
    %84 = vector.broadcast %83 : vector<64x1xf32> to vector<64x128xf32>
    %85 = arith.mulf %80, %84 : vector<64x128xf32>
    %86 = arith.truncf %85 : vector<64x128xf32> to vector<64x128xbf16>
    %c0_42 = arith.constant 0 : index
    %c128 = arith.constant 128 : index
    %87 = vector.load %arg14[%c0_42, %c128] : memref<64x256xbf16, #tpu.memory_space<vmem>>, vector<64x128xbf16>
    tpu.vector_store %arg14[%c0_42, %c128], %86 {strides = array<i32>} : memref<64x256xbf16, #tpu.memory_space<vmem>>, vector<64x128xbf16>,
    %c0_43 = arith.constant 0 : index
    %c0_44 = arith.constant 0 : index
    %88 = vector.load %arg14[%c0_43, %c0_44] : memref<64x256xbf16, #tpu.memory_space<vmem>>, vector<64x256xbf16>
    %c0_45 = arith.constant 0 : index
    %c0_46 = arith.constant 0 : index
    %c0_47 = arith.constant 0 : index
    %89 = vector.load %arg7[%c0_45, %c0_46, %c0_47] : memref<1x256x8xbf16, #tpu.memory_space<vmem>>, vector<1x256x8xbf16>
    %90 = vector.shape_cast %89 : vector<1x256x8xbf16> to vector<256x8xbf16>
    %cst_48 = arith.constant dense<0.000000e+00> : vector<64x8xf32>
    %91 = tpu.matmul %88, %90, %cst_48 {dimension_numbers = #tpu.dot_dimension_numbers<[1], [0], [0], [1], [0, 0, 1, 1], [], []>} : vector<64x256xbf16>, vector<256x8xbf16>, vector<64x8xf32> -> vector<64x8xf32>
    %92 = arith.addf %91, %1 : vector<64x8xf32>
    %93 = arith.mulf %92, %92 : vector<64x8xf32>
    %cst_49 = arith.constant dense<0.000000e+00> : vector<64xf32>
    %94 = vector.multi_reduction <add>, %93, %cst_49 [1] : vector<64x8xf32> to vector<64xf32>
    %95 = vector.shape_cast %94 : vector<64xf32> to vector<64x1xf32>
    %96 = math.sqrt %95 : vector<64x1xf32>
    %cst_50 = arith.constant 9.99999996E-13 : f32
    %97 = vector.broadcast %cst_50 : f32 to vector<64x1xf32>
    %98 = arith.maximumf %96, %97 : vector<64x1xf32>
    %99 = vector.broadcast %98 : vector<64x1xf32> to vector<64x8xf32>
    %100 = arith.divf %92, %99 : vector<64x8xf32>
    %cst_51 = arith.constant 2.82842708 : f32
    %101 = vector.broadcast %cst_51 : f32 to vector<64x8xf32>
    %102 = arith.mulf %100, %101 : vector<64x8xf32>
    %c0_52 = arith.constant 0 : index
    %c0_53 = arith.constant 0 : index
    %103 = vector.load %arg8[%c0_52, %c0_53] : memref<1x8xf32, #tpu.memory_space<vmem>>, vector<1x8xf32>
    %104 = vector.broadcast %103 : vector<1x8xf32> to vector<64x8xf32>
    %105 = arith.mulf %102, %104 : vector<64x8xf32>
    %106 = arith.truncf %105 : vector<64x8xf32> to vector<64x8xbf16>
    %c0_54 = arith.constant 0 : index
    %c0_55 = arith.constant 0 : index
    %107 = vector.load %arg9[%c0_54, %c0_55] : memref<8x32xbf16, #tpu.memory_space<vmem>>, vector<8x32xbf16>
    %cst_56 = arith.constant dense<0.000000e+00> : vector<64x32xf32>
    %108 = tpu.matmul %106, %107, %cst_56 {dimension_numbers = #tpu.dot_dimension_numbers<[1], [0], [0], [1], [0, 0, 1, 1], [], []>} : vector<64x8xbf16>, vector<8x32xbf16>, vector<64x32xf32> -> vector<64x32xf32>
    %c0_57 = arith.constant 0 : index
    %c0_58 = arith.constant 0 : index
    %109 = vector.load %arg10[%c0_57, %c0_58] : memref<1x32xf32, #tpu.memory_space<vmem>>, vector<1x32xf32>
    %110 = vector.broadcast %109 : vector<1x32xf32> to vector<64x32xf32>
    %111 = arith.addf %108, %110 : vector<64x32xf32>
    %112 = arith.mulf %111, %111 : vector<64x32xf32>
    %113 = arith.mulf %111, %112 : vector<64x32xf32>
    %cst_59 = arith.constant 4.471500e-02 : f32
    %114 = vector.broadcast %cst_59 : f32 to vector<64x32xf32>
    %115 = arith.mulf %114, %113 : vector<64x32xf32>
    %116 = arith.addf %111, %115 : vector<64x32xf32>
    %cst_60 = arith.constant 0.797884583 : f32
    %117 = vector.broadcast %cst_60 : f32 to vector<64x32xf32>
    %118 = arith.mulf %117, %116 : vector<64x32xf32>
    %119 = math.tanh %118 : vector<64x32xf32>
    %cst_61 = arith.constant 1.000000e+00 : f32
    %120 = vector.broadcast %cst_61 : f32 to vector<64x32xf32>
    %121 = arith.addf %120, %119 : vector<64x32xf32>
    %cst_62 = arith.constant 5.000000e-01 : f32
    %122 = vector.broadcast %cst_62 : f32 to vector<64x32xf32>
    %123 = arith.mulf %122, %121 : vector<64x32xf32>
    %124 = arith.mulf %111, %123 : vector<64x32xf32>
    %125 = arith.truncf %124 : vector<64x32xf32> to vector<64x32xbf16>
    %c0_63 = arith.constant 0 : index
    %c0_64 = arith.constant 0 : index
    %126 = vector.load %arg11[%c0_63, %c0_64] : memref<32x8xbf16, #tpu.memory_space<vmem>>, vector<32x8xbf16>
    %cst_65 = arith.constant dense<0.000000e+00> : vector<64x8xf32>
    %127 = tpu.matmul %125, %126, %cst_65 {dimension_numbers = #tpu.dot_dimension_numbers<[1], [0], [0], [1], [0, 0, 1, 1], [], []>} : vector<64x32xbf16>, vector<32x8xbf16>, vector<64x8xf32> -> vector<64x8xf32>
    %c0_66 = arith.constant 0 : index
    %c0_67 = arith.constant 0 : index
    %128 = vector.load %arg12[%c0_66, %c0_67] : memref<1x8xf32, #tpu.memory_space<vmem>>, vector<1x8xf32>
    %129 = vector.broadcast %128 : vector<1x8xf32> to vector<64x8xf32>
    %130 = arith.addf %127, %129 : vector<64x8xf32>
    %131 = arith.addf %130, %92 : vector<64x8xf32>
    %c0_68 = arith.constant 0 : index
    %c0_69 = arith.constant 0 : index
    %c0_70 = arith.constant 0 : index
    %132 = vector.load %arg13[%c0_68, %c0_69, %c0_70] : memref<1x64x8xf32, #tpu.memory_space<vmem>>, vector<1x64x8xf32>
    %133 = vector.shape_cast %132 : vector<1x64x8xf32> to vector<64x8xf32>
    %134 = vector.shape_cast %131 : vector<64x8xf32> to vector<1x64x8xf32>
    tpu.vector_store %arg13[%c0_68, %c0_69, %c0_70], %134 {strides = array<i32>} : memref<1x64x8xf32, #tpu.memory_space<vmem>>, vector<1x64x8xf32>,
    return
  }
  func.func @transform_0(%arg0: i32, %arg1: i32) -> (i32, i32, i32) {
    %c0_i32 = arith.constant 0 : i32
    %c0_i32_0 = arith.constant 0 : i32
    return %arg0, %arg1, %c0_i32 : i32, i32, i32
  }
  func.func @transform_1(%arg0: i32, %arg1: i32) -> (i32, i32) {
    %c0_i32 = arith.constant 0 : i32
    %c0_i32_0 = arith.constant 0 : i32
    %c0_i32_1 = arith.constant 0 : i32
    return %c0_i32, %c0_i32_0 : i32, i32
  }
  func.func @transform_2(%arg0: i32, %arg1: i32) -> (i32, i32) {
    %c0_i32 = arith.constant 0 : i32
    %c0_i32_0 = arith.constant 0 : i32
    %c0_i32_1 = arith.constant 0 : i32
    return %c0_i32, %c0_i32_0 : i32, i32
  }
  func.func @transform_3(%arg0: i32, %arg1: i32) -> (i32, i32, i32, i32) {
    %c0_i32 = arith.constant 0 : i32
    %c0_i32_0 = arith.constant 0 : i32
    %c0_i32_1 = arith.constant 0 : i32
    %c0_i32_2 = arith.constant 0 : i32
    return %arg0, %c0_i32, %c0_i32_0, %c0_i32_1 : i32, i32, i32, i32
  }
  func.func @transform_4(%arg0: i32, %arg1: i32) -> (i32, i32, i32, i32) {
    %c0_i32 = arith.constant 0 : i32
    %c0_i32_0 = arith.constant 0 : i32
    %c0_i32_1 = arith.constant 0 : i32
    %c0_i32_2 = arith.constant 0 : i32
    return %arg0, %c0_i32, %c0_i32_0, %c0_i32_1 : i32, i32, i32, i32
  }
  func.func @transform_5(%arg0: i32, %arg1: i32) -> (i32, i32, i32) {
    %c0_i32 = arith.constant 0 : i32
    %c0_i32_0 = arith.constant 0 : i32
    %c0_i32_1 = arith.constant 0 : i32
    return %arg0, %c0_i32, %c0_i32_0 : i32, i32, i32
  }
  func.func @transform_6(%arg0: i32, %arg1: i32) -> (i32, i32) {
    %c0_i32 = arith.constant 0 : i32
    %c0_i32_0 = arith.constant 0 : i32
    %c0_i32_1 = arith.constant 0 : i32
    return %c0_i32, %c0_i32_0 : i32, i32
  }
  func.func @transform_7(%arg0: i32, %arg1: i32) -> (i32, i32) {
    %c0_i32 = arith.constant 0 : i32
    %c0_i32_0 = arith.constant 0 : i32
    %c0_i32_1 = arith.constant 0 : i32
    return %c0_i32, %c0_i32_0 : i32, i32
  }
  func.func @transform_8(%arg0: i32, %arg1: i32) -> (i32, i32) {
    %c0_i32 = arith.constant 0 : i32
    %c0_i32_0 = arith.constant 0 : i32
    %c0_i32_1 = arith.constant 0 : i32
    return %c0_i32, %c0_i32_0 : i32, i32
  }
  func.func @transform_9(%arg0: i32, %arg1: i32) -> (i32, i32) {
    %c0_i32 = arith.constant 0 : i32
    %c0_i32_0 = arith.constant 0 : i32
    %c0_i32_1 = arith.constant 0 : i32
    return %c0_i32, %c0_i32_0 : i32, i32
  }
  func.func @transform_10(%arg0: i32, %arg1: i32) -> (i32, i32) {
    %c0_i32 = arith.constant 0 : i32
    %c0_i32_0 = arith.constant 0 : i32
    %c0_i32_1 = arith.constant 0 : i32
    return %c0_i32, %c0_i32_0 : i32, i32
  }
  func.func @transform_11(%arg0: i32, %arg1: i32) -> (i32, i32, i32) {
    %c0_i32 = arith.constant 0 : i32
    %c0_i32_0 = arith.constant 0 : i32
    return %arg0, %arg1, %c0_i32 : i32, i32, i32
  }
}

</mosaic_0001>

<llo_original>
// kernel: tpu_custom_call.1
$region0: #{tpu_custom_call.1}
  #allocation0 [shape = 'u32[]', space=smem, size = 0x4, offset = 0x4, fixed_abs, tag = 'smem constant byte address 0x4 - core index']
  #allocation1 [shape = 'u32[144,128]{1,0:T(1,128)}', space=vmem, size = 0x12000, scoped, tag = 'internal scratch']
  #allocation2 [shape = 'bf16[64,256]{1,0:T(16,128)(2,1)}', space=vmem, size = 0x8000, scoped, tag = 'scratch operand']
  %s0 = inlined_call_operand.vmem [shape: f32[2,256,8], index: 0, kind: input, shape index: {}]
  %s1 = inlined_call_operand.vmem [shape: f32[1,8], index: 1, kind: input, shape index: {}]
  %s2 = inlined_call_operand.vmem [shape: bf16[8,32], index: 2, kind: input, shape index: {}]
  %s3 = inlined_call_operand.vmem [shape: bf16[2,2,16,128], index: 3, kind: input, shape index: {}]
  %s4 = inlined_call_operand.vmem [shape: f32[2,2,1,128], index: 4, kind: input, shape index: {}]
  %s5 = inlined_call_operand.vmem [shape: bf16[2,256,8], index: 5, kind: input, shape index: {}]
  %s6 = inlined_call_operand.vmem [shape: f32[1,8], index: 6, kind: input, shape index: {}]
  %s7 = inlined_call_operand.vmem [shape: bf16[8,32], index: 7, kind: input, shape index: {}]
  %s8 = inlined_call_operand.vmem [shape: f32[1,32], index: 8, kind: input, shape index: {}]
  %s9 = inlined_call_operand.vmem [shape: bf16[32,8], index: 9, kind: input, shape index: {}]
  %s10 = inlined_call_operand.vmem [shape: f32[1,8], index: 10, kind: input, shape index: {}]
  %s11 = inlined_call_operand.vmem [shape: f32[2,256,8], index: 11, kind: output, shape index: {}]
  %s12 = sld [smem:[#allocation0]]
  $region77: #{tpu_custom_call.1} parent=0
    _
  %s14 = ssub.s32 1, %s12
  %s15 = scalar_select 0, %s14, %s12
  loop: start=0, step=1, limit=10
  $region2: #{tpu_custom_call.1} parent=0 // loop_pre_header
    _
  $region3: #{tpu_custom_call.1} parent=0 // loop_header
    %s17 = sphi 0, %s21
    %p18 = scmp.ge.s32.totalorder %s17, 10
    %s24 = sphi 0, %s36
    %s25 = sphi 0, %s32
    %s26 = sphi 0, %s24
    %s27 = sphi 0, %s25
    %s28 = sphi 0, %s26
    %s29 = sphi 0, %s27
    %s41 = sphi 0, %s43
    %s44 = sphi 0, %s41
    %s45 = sphi 0, %s44
    %s61 = sphi 0, %s45
    %s65 = sphi 0, %s65
    %s67 = sphi 0, %s65
    %s68 = sphi 0, %s67
    %s82 = sphi 0, %s68
    %s86 = sphi 0, %s86
    %s88 = sphi 0, %s86
    %s89 = sphi 0, %s88
    %s103 = sphi 0, %s89
    %s109 = sphi 0, %s111
    %s112 = sphi 0, %s109
    %s113 = sphi 0, %s112
    %s129 = sphi 0, %s113
    %s135 = sphi 0, %s137
    %s138 = sphi 0, %s135
    %s139 = sphi 0, %s138
    %s155 = sphi 0, %s139
    %s161 = sphi 0, %s163
    %s164 = sphi 0, %s161
    %s165 = sphi 0, %s164
    %s181 = sphi 0, %s165
    %s185 = sphi 0, %s185
    %s187 = sphi 0, %s185
    %s188 = sphi 0, %s187
    %s202 = sphi 0, %s188
    %s206 = sphi 0, %s206
    %s208 = sphi 0, %s206
    %s209 = sphi 0, %s208
    %s223 = sphi 0, %s209
    %s227 = sphi 0, %s227
    %s229 = sphi 0, %s227
    %s230 = sphi 0, %s229
    %s244 = sphi 0, %s230
    %s248 = sphi 0, %s248
    %s250 = sphi 0, %s248
    %s251 = sphi 0, %s250
    %s265 = sphi 0, %s251
    %s269 = sphi 0, %s269
    %s271 = sphi 0, %s269
    %s272 = sphi 0, %s271
    %s286 = sphi 0, %s272
    %s294 = sphi 0, %s296
    %s297 = sphi 0, %s294
    %s298 = sphi 0, %s297
    %s314 = sphi 0, %s298
  $region4: #{tpu_custom_call.1} parent=0 // loop_header_branch
    %20 = sbr.rel (%p18) target = $region8
  $region5: #{tpu_custom_call.1} parent=0 // loop_body
    %s22 = ssub.s32 %s17, 1
    %s23 = ssub.s32 %s17, 2
    %s30 = sadd.s32 1, %s25
    %p31 = scmp.ge.s32.totalorder %s30, 4
    %s32 = scalar_select %p31, 0, %s30
    %s33 = sadd.s32 1, %s24
    %s34 = scalar_select %p31, %s33, %s24
    %p35 = scmp.ge.s32.totalorder %s34, 2
    %s36 = scalar_select %p35, 0, %s34
    %s37 = ssub.s32 %s24, %s36
    %s38 = ssub.s32 %s25, %s32
    %s39 = sor.u32 %s37, %s38
    %p40 = scmp.eq.s32.totalorder %s39, 0
    %s42 = sadd.s32 %s41, 1
    %s43 = scalar_select %p40, %s41, %s42
    %p46 = pneg %p40
    %p47 = scmp.eq.s32.totalorder %s17, 7
    %p48 = por %p46, %p47
    %p49 = scmp.ne.s32.totalorder %s41, %s44
    %p50 = scmp.eq.s32.totalorder %s17, 0
    %p51 = por %p49, %p50
    %p52 = scmp.ne.s32.totalorder %s41, %s44
    %p53 = scmp.eq.s32.totalorder %s22, 7
    %p54 = por %p52, %p53
    %p55 = scmp.ne.s32.totalorder %s44, %s45
    %p56 = scmp.eq.s32.totalorder %s22, 0
    %p57 = por %p55, %p56
    %p58 = scmp.ne.s32.totalorder %s44, %s45
    %p59 = scmp.eq.s32.totalorder %s23, 7
    %p60 = por %p58, %p59
    %p62 = scmp.ne.s32.totalorder %s45, %s61
    %p63 = scmp.eq.s32.totalorder %s23, 0
    %p64 = por %p62, %p63
    %s66 = sadd.s32 %s65, 1
    %p69 = scmp.eq.s32.totalorder %s17, 7
    %p70 = scmp.ne.s32.totalorder %s65, %s67
    %p71 = scmp.eq.s32.totalorder %s17, 0
    %p72 = por %p70, %p71
    %p73 = scmp.ne.s32.totalorder %s65, %s67
    %p74 = scmp.eq.s32.totalorder %s22, 7
    %p75 = por %p73, %p74
    %p76 = scmp.ne.s32.totalorder %s67, %s68
    %p77 = scmp.eq.s32.totalorder %s22, 0
    %p78 = por %p76, %p77
    %p79 = scmp.ne.s32.totalorder %s67, %s68
    %p80 = scmp.eq.s32.totalorder %s23, 7
    %p81 = por %p79, %p80
    %p83 = scmp.ne.s32.totalorder %s68, %s82
    %p84 = scmp.eq.s32.totalorder %s23, 0
    %p85 = por %p83, %p84
    %s87 = sadd.s32 %s86, 1
    %p90 = scmp.eq.s32.totalorder %s17, 7
    %p91 = scmp.ne.s32.totalorder %s86, %s88
    %p92 = scmp.eq.s32.totalorder %s17, 0
    %p93 = por %p91, %p92
    %p94 = scmp.ne.s32.totalorder %s86, %s88
    %p95 = scmp.eq.s32.totalorder %s22, 7
    %p96 = por %p94, %p95
    %p97 = scmp.ne.s32.totalorder %s88, %s89
    %p98 = scmp.eq.s32.totalorder %s22, 0
    %p99 = por %p97, %p98
    %p100 = scmp.ne.s32.totalorder %s88, %s89
    %p101 = scmp.eq.s32.totalorder %s23, 7
    %p102 = por %p100, %p101
    %p104 = scmp.ne.s32.totalorder %s89, %s103
    %p105 = scmp.eq.s32.totalorder %s23, 0
    %p106 = por %p104, %p105
    %s107 = ssub.s32 %s24, %s36
    %p108 = scmp.eq.s32.totalorder %s107, 0
    %s110 = sadd.s32 %s109, 1
    %s111 = scalar_select %p108, %s109, %s110
    %p114 = pneg %p108
    %p115 = scmp.eq.s32.totalorder %s17, 7
    %p116 = por %p114, %p115
    %p117 = scmp.ne.s32.totalorder %s109, %s112
    %p118 = scmp.eq.s32.totalorder %s17, 0
    %p119 = por %p117, %p118
    %p120 = scmp.ne.s32.totalorder %s109, %s112
    %p121 = scmp.eq.s32.totalorder %s22, 7
    %p122 = por %p120, %p121
    %p123 = scmp.ne.s32.totalorder %s112, %s113
    %p124 = scmp.eq.s32.totalorder %s22, 0
    %p125 = por %p123, %p124
    %p126 = scmp.ne.s32.totalorder %s112, %s113
    %p127 = scmp.eq.s32.totalorder %s23, 7
    %p128 = por %p126, %p127
    %p130 = scmp.ne.s32.totalorder %s113, %s129
    %p131 = scmp.eq.s32.totalorder %s23, 0
    %p132 = por %p130, %p131
    %s133 = ssub.s32 %s24, %s36
    %p134 = scmp.eq.s32.totalorder %s133, 0
    %s136 = sadd.s32 %s135, 1
    %s137 = scalar_select %p134, %s135, %s136
    %p140 = pneg %p134
    %p141 = scmp.eq.s32.totalorder %s17, 7
    %p142 = por %p140, %p141
    %p143 = scmp.ne.s32.totalorder %s135, %s138
    %p144 = scmp.eq.s32.totalorder %s17, 0
    %p145 = por %p143, %p144
    %p146 = scmp.ne.s32.totalorder %s135, %s138
    %p147 = scmp.eq.s32.totalorder %s22, 7
    %p148 = por %p146, %p147
    %p149 = scmp.ne.s32.totalorder %s138, %s139
    %p150 = scmp.eq.s32.totalorder %s22, 0
    %p151 = por %p149, %p150
    %p152 = scmp.ne.s32.totalorder %s138, %s139
    %p153 = scmp.eq.s32.totalorder %s23, 7
    %p154 = por %p152, %p153
    %p156 = scmp.ne.s32.totalorder %s139, %s155
    %p157 = scmp.eq.s32.totalorder %s23, 0
    %p158 = por %p156, %p157
    %s159 = ssub.s32 %s24, %s36
    %p160 = scmp.eq.s32.totalorder %s159, 0
    %s162 = sadd.s32 %s161, 1
    %s163 = scalar_select %p160, %s161, %s162
    %p166 = pneg %p160
    %p167 = scmp.eq.s32.totalorder %s17, 7
    %p168 = por %p166, %p167
    %p169 = scmp.ne.s32.totalorder %s161, %s164
    %p170 = scmp.eq.s32.totalorder %s17, 0
    %p171 = por %p169, %p170
    %p172 = scmp.ne.s32.totalorder %s161, %s164
    %p173 = scmp.eq.s32.totalorder %s22, 7
    %p174 = por %p172, %p173
    %p175 = scmp.ne.s32.totalorder %s164, %s165
    %p176 = scmp.eq.s32.totalorder %s22, 0
    %p177 = por %p175, %p176
    %p178 = scmp.ne.s32.totalorder %s164, %s165
    %p179 = scmp.eq.s32.totalorder %s23, 7
    %p180 = por %p178, %p179
    %p182 = scmp.ne.s32.totalorder %s165, %s181
    %p183 = scmp.eq.s32.totalorder %s23, 0
    %p184 = por %p182, %p183
    %s186 = sadd.s32 %s185, 1
    %p189 = scmp.eq.s32.totalorder %s17, 7
    %p190 = scmp.ne.s32.totalorder %s185, %s187
    %p191 = scmp.eq.s32.totalorder %s17, 0
    %p192 = por %p190, %p191
    %p193 = scmp.ne.s32.totalorder %s185, %s187
    %p194 = scmp.eq.s32.totalorder %s22, 7
    %p195 = por %p193, %p194
    %p196 = scmp.ne.s32.totalorder %s187, %s188
    %p197 = scmp.eq.s32.totalorder %s22, 0
    %p198 = por %p196, %p197
    %p199 = scmp.ne.s32.totalorder %s187, %s188
    %p200 = scmp.eq.s32.totalorder %s23, 7
    %p201 = por %p199, %p200
    %p203 = scmp.ne.s32.totalorder %s188, %s202
    %p204 = scmp.eq.s32.totalorder %s23, 0
    %p205 = por %p203, %p204
    %s207 = sadd.s32 %s206, 1
    %p210 = scmp.eq.s32.totalorder %s17, 7
    %p211 = scmp.ne.s32.totalorder %s206, %s208
    %p212 = scmp.eq.s32.totalorder %s17, 0
    %p213 = por %p211, %p212
    %p214 = scmp.ne.s32.totalorder %s206, %s208
    %p215 = scmp.eq.s32.totalorder %s22, 7
    %p216 = por %p214, %p215
    %p217 = scmp.ne.s32.totalorder %s208, %s209
    %p218 = scmp.eq.s32.totalorder %s22, 0
    %p219 = por %p217, %p218
    %p220 = scmp.ne.s32.totalorder %s208, %s209
    %p221 = scmp.eq.s32.totalorder %s23, 7
    %p222 = por %p220, %p221
    %p224 = scmp.ne.s32.totalorder %s209, %s223
    %p225 = scmp.eq.s32.totalorder %s23, 0
    %p226 = por %p224, %p225
    %s228 = sadd.s32 %s227, 1
    %p231 = scmp.eq.s32.totalorder %s17, 7
    %p232 = scmp.ne.s32.totalorder %s227, %s229
    %p233 = scmp.eq.s32.totalorder %s17, 0
    %p234 = por %p232, %p233
    %p235 = scmp.ne.s32.totalorder %s227, %s229
    %p236 = scmp.eq.s32.totalorder %s22, 7
    %p237 = por %p235, %p236
    %p238 = scmp.ne.s32.totalorder %s229, %s230
    %p239 = scmp.eq.s32.totalorder %s22, 0
    %p240 = por %p238, %p239
    %p241 = scmp.ne.s32.totalorder %s229, %s230
    %p242 = scmp.eq.s32.totalorder %s23, 7
    %p243 = por %p241, %p242
    %p245 = scmp.ne.s32.totalorder %s230, %s244
    %p246 = scmp.eq.s32.totalorder %s23, 0
    %p247 = por %p245, %p246
    %s249 = sadd.s32 %s248, 1
    %p252 = scmp.eq.s32.totalorder %s17, 7
    %p253 = scmp.ne.s32.totalorder %s248, %s250
    %p254 = scmp.eq.s32.totalorder %s17, 0
    %p255 = por %p253, %p254
    %p256 = scmp.ne.s32.totalorder %s248, %s250
    %p257 = scmp.eq.s32.totalorder %s22, 7
    %p258 = por %p256, %p257
    %p259 = scmp.ne.s32.totalorder %s250, %s251
    %p260 = scmp.eq.s32.totalorder %s22, 0
    %p261 = por %p259, %p260
    %p262 = scmp.ne.s32.totalorder %s250, %s251
    %p263 = scmp.eq.s32.totalorder %s23, 7
    %p264 = por %p262, %p263
    %p266 = scmp.ne.s32.totalorder %s251, %s265
    %p267 = scmp.eq.s32.totalorder %s23, 0
    %p268 = por %p266, %p267
    %s270 = sadd.s32 %s269, 1
    %p273 = scmp.eq.s32.totalorder %s17, 7
    %p274 = scmp.ne.s32.totalorder %s269, %s271
    %p275 = scmp.eq.s32.totalorder %s17, 0
    %p276 = por %p274, %p275
    %p277 = scmp.ne.s32.totalorder %s269, %s271
    %p278 = scmp.eq.s32.totalorder %s22, 7
    %p279 = por %p277, %p278
    %p280 = scmp.ne.s32.totalorder %s271, %s272
    %p281 = scmp.eq.s32.totalorder %s22, 0
    %p282 = por %p280, %p281
    %p283 = scmp.ne.s32.totalorder %s271, %s272
    %p284 = scmp.eq.s32.totalorder %s23, 7
    %p285 = por %p283, %p284
    %p287 = scmp.ne.s32.totalorder %s272, %s286
    %p288 = scmp.eq.s32.totalorder %s23, 0
    %p289 = por %p287, %p288
    %s290 = ssub.s32 %s24, %s36
    %s291 = ssub.s32 %s25, %s32
    %s292 = sor.u32 %s290, %s291
    %p293 = scmp.eq.s32.totalorder %s292, 0
    %s295 = sadd.s32 %s294, 1
    %s296 = scalar_select %p293, %s294, %s295
    %p299 = pneg %p293
    %p300 = scmp.eq.s32.totalorder %s17, 7
    %p301 = por %p299, %p300
    %p302 = scmp.ne.s32.totalorder %s294, %s297
    %p303 = scmp.eq.s32.totalorder %s17, 0
    %p304 = por %p302, %p303
    %p305 = scmp.ne.s32.totalorder %s294, %s297
    %p306 = scmp.eq.s32.totalorder %s22, 7
    %p307 = por %p305, %p306
    %p308 = scmp.ne.s32.totalorder %s297, %s298
    %p309 = scmp.eq.s32.totalorder %s22, 0
    %p310 = por %p308, %p309
    %p311 = scmp.ne.s32.totalorder %s297, %s298
    %p312 = scmp.eq.s32.totalorder %s23, 7
    %p313 = por %p311, %p312
    %p315 = scmp.ne.s32.totalorder %s298, %s314
    %p316 = scmp.eq.s32.totalorder %s23, 0
    %p317 = por %p315, %p316
    %p318 = scmp.le.s32.totalorder 1, %s17
    %p319 = scmp.lt.s32.totalorder %s17, 9
    %p320 = pnand %p318, %p319
    %p321 = pneg %p320
    // Predicated region
    $region9: #{tpu_custom_call.1} parent=5 // pred_check
      _
    $region10: #{tpu_custom_call.1} parent=5 // pred_check_branch
      %323 = sbr.rel (%p320) target = $region12
    $region11: #{tpu_custom_call.1} parent=5 // pred_region
      %s324 = ssub.s32 %s17, 1
      // Predicated region
      $region13: #{tpu_custom_call.1} parent=11 // pred_check
        %p325 = pneg %p78
      $region14: #{tpu_custom_call.1} parent=11 // pred_check_branch
        %327 = sbr.rel (%p325) target = $region16
      $region15: #{tpu_custom_call.1} parent=11 // pred_region
        _
      $region16: #{tpu_custom_call.1} parent=11 // pred_fallthru
        _
      // Predicated region
      $region17: #{tpu_custom_call.1} parent=11 // pred_check
        %p328 = pneg %p99
      $region18: #{tpu_custom_call.1} parent=11 // pred_check_branch
        %330 = sbr.rel (%p328) target = $region20
      $region19: #{tpu_custom_call.1} parent=11 // pred_region
        _
      $region20: #{tpu_custom_call.1} parent=11 // pred_fallthru
        _
      // Predicated region
      $region21: #{tpu_custom_call.1} parent=11 // pred_check
        %p331 = pneg %p198
      $region22: #{tpu_custom_call.1} parent=11 // pred_check_branch
        %333 = sbr.rel (%p331) target = $region24
      $region23: #{tpu_custom_call.1} parent=11 // pred_region
        _
      $region24: #{tpu_custom_call.1} parent=11 // pred_fallthru
        _
      // Predicated region
      $region25: #{tpu_custom_call.1} parent=11 // pred_check
        %p334 = pneg %p219
      $region26: #{tpu_custom_call.1} parent=11 // pred_check_branch
        %336 = sbr.rel (%p334) target = $region28
      $region27: #{tpu_custom_call.1} parent=11 // pred_region
        _
      $region28: #{tpu_custom_call.1} parent=11 // pred_fallthru
        _
      // Predicated region
      $region29: #{tpu_custom_call.1} parent=11 // pred_check
        %p337 = pneg %p240
      $region30: #{tpu_custom_call.1} parent=11 // pred_check_branch
        %339 = sbr.rel (%p337) target = $region32
      $region31: #{tpu_custom_call.1} parent=11 // pred_region
        _
      $region32: #{tpu_custom_call.1} parent=11 // pred_fallthru
        _
      // Predicated region
      $region33: #{tpu_custom_call.1} parent=11 // pred_check
        %p340 = pneg %p261
      $region34: #{tpu_custom_call.1} parent=11 // pred_check_branch
        %342 = sbr.rel (%p340) target = $region36
      $region35: #{tpu_custom_call.1} parent=11 // pred_region
        _
      $region36: #{tpu_custom_call.1} parent=11 // pred_fallthru
        _
      // Predicated region
      $region37: #{tpu_custom_call.1} parent=11 // pred_check
        %p343 = pneg %p282
      $region38: #{tpu_custom_call.1} parent=11 // pred_check_branch
        %345 = sbr.rel (%p343) target = $region40
      $region39: #{tpu_custom_call.1} parent=11 // pred_region
        _
      $region40: #{tpu_custom_call.1} parent=11 // pred_fallthru
        _
    $region12: #{tpu_custom_call.1} parent=5 // pred_fallthru
      _
    %p346 = scmp.lt.s32.totalorder %s17, 8
    // Predicated region
    $region41: #{tpu_custom_call.1} parent=5 // pred_check
      %p347 = pneg %p346
    $region42: #{tpu_custom_call.1} parent=5 // pred_check_branch
      %349 = sbr.rel (%p347) target = $region44
    $region43: #{tpu_custom_call.1} parent=5 // pred_region
      // Predicated region
      $region45: #{tpu_custom_call.1} parent=43 // pred_check
        %p350 = pneg %p51
      $region46: #{tpu_custom_call.1} parent=43 // pred_check_branch
        %352 = sbr.rel (%p350) target = $region48
      $region47: #{tpu_custom_call.1} parent=43 // pred_region
        %s353 = smul.u32 8, %s25
        %p354 = scmp.lt.s32.totalorder %s24, 1
        %s355 = scalar_select %p354, %s24, 1
        %p356 = scmp.lt.s32.totalorder %s353, 31
        %s357 = scalar_select %p356, %s353, 31
        %s358 = smul.addr %s355, 32
        %s359 = sadd.s32 %s357, %s358
        %s360 = smul.addr %s359, 8
        %s361 = scalar_lea.vmem %s0, %s360
        %s362 = smul.u32 8, %s25
      $region48: #{tpu_custom_call.1} parent=43 // pred_fallthru
        _
      // Predicated region
      $region49: #{tpu_custom_call.1} parent=43 // pred_check
        %p363 = pneg %p119
      $region50: #{tpu_custom_call.1} parent=43 // pred_check_branch
        %365 = sbr.rel (%p363) target = $region52
      $region51: #{tpu_custom_call.1} parent=43 // pred_region
        %p366 = scmp.lt.s32.totalorder %s24, 1
        %s367 = scalar_select %p366, %s24, 1
        %s368 = smul.addr %s367, 4
        %s369 = smul.addr %s368, 4
        %s370 = scalar_lea.vmem %s3, %s369
      $region52: #{tpu_custom_call.1} parent=43 // pred_fallthru
        _
      // Predicated region
      $region53: #{tpu_custom_call.1} parent=43 // pred_check
        %p371 = pneg %p145
      $region54: #{tpu_custom_call.1} parent=43 // pred_check_branch
        %373 = sbr.rel (%p371) target = $region56
      $region55: #{tpu_custom_call.1} parent=43 // pred_region
        %p374 = scmp.lt.s32.totalorder %s24, 1
        %s375 = scalar_select %p374, %s24, 1
        %s376 = smul.addr %s375, 2
        %s377 = scalar_lea.vmem %s4, %s376
      $region56: #{tpu_custom_call.1} parent=43 // pred_fallthru
        _
      // Predicated region
      $region57: #{tpu_custom_call.1} parent=43 // pred_check
        %p378 = pneg %p171
      $region58: #{tpu_custom_call.1} parent=43 // pred_check_branch
        %380 = sbr.rel (%p378) target = $region60
      $region59: #{tpu_custom_call.1} parent=43 // pred_region
        %p381 = scmp.lt.s32.totalorder %s24, 1
        %s382 = scalar_select %p381, %s24, 1
        %s383 = smul.addr %s382, 32
        %s384 = smul.addr %s383, 4
        %s385 = scalar_lea.vmem %s5, %s384
      $region60: #{tpu_custom_call.1} parent=43 // pred_fallthru
        _
    $region44: #{tpu_custom_call.1} parent=5 // pred_fallthru
      _
    %p386 = scmp.le.s32.totalorder 1, %s17
    %p387 = scmp.lt.s32.totalorder %s17, 9
    %p388 = pnand %p386, %p387
    %p389 = pneg %p388
    // Predicated region
    $region61: #{tpu_custom_call.1} parent=5 // pred_check
      _
    $region62: #{tpu_custom_call.1} parent=5 // pred_check_branch
      %391 = sbr.rel (%p388) target = $region64
    $region63: #{tpu_custom_call.1} parent=5 // pred_region
      %s392 = ssub.s32 %s17, 1
      %s393 = smul.u32 8, %s27
      %p394 = scmp.lt.s32.totalorder %s26, 1
      %s395 = scalar_select %p394, %s26, 1
      %p396 = scmp.lt.s32.totalorder %s393, 31
      %s397 = scalar_select %p396, %s393, 31
      %s398 = smul.addr %s395, 32
      %s399 = sadd.s32 %s397, %s398
      %s400 = smul.addr %s399, 8
      %s401 = scalar_lea.vmem %s0, %s400
      %p402 = pneg %p57
      %p403 = pneg %p54
      %p404 = pneg %p78
      %p405 = pneg %p75
      %p406 = pneg %p99
      %p407 = pneg %p96
      %p408 = scmp.lt.s32.totalorder %s26, 1
      %s409 = scalar_select %p408, %s26, 1
      %s410 = smul.addr %s409, 4
      %s411 = smul.addr %s410, 4
      %s412 = scalar_lea.vmem %s3, %s411
      %p413 = pneg %p125
      %p414 = pneg %p122
      %p415 = scmp.lt.s32.totalorder %s26, 1
      %s416 = scalar_select %p415, %s26, 1
      %s417 = smul.addr %s416, 2
      %s418 = scalar_lea.vmem %s4, %s417
      %p419 = pneg %p151
      %p420 = pneg %p148
      %p421 = scmp.lt.s32.totalorder %s26, 1
      %s422 = scalar_select %p421, %s26, 1
      %s423 = smul.addr %s422, 32
      %s424 = smul.addr %s423, 4
      %s425 = scalar_lea.vmem %s5, %s424
      %p426 = pneg %p177
      %p427 = pneg %p174
      %p428 = pneg %p198
      %p429 = pneg %p195
      %p430 = pneg %p219
      %p431 = pneg %p216
      %p432 = pneg %p240
      %p433 = pneg %p237
      %p434 = pneg %p261
      %p435 = pneg %p258
      %p436 = pneg %p282
      %p437 = pneg %p279
      %p438 = pneg %p310
      %p439 = pneg %p307
      %s440 = smul.u32 8, %s27
      %p441 = scmp.lt.s32.totalorder %s26, 1
      %s442 = scalar_select %p441, %s26, 1
      %p443 = scmp.lt.s32.totalorder %s440, 31
      %s444 = scalar_select %p443, %s440, 31
      %s445 = smul.addr %s442, 32
      %s446 = sadd.s32 %s444, %s445
      %s447 = smul.addr %s446, 8
      %s448 = scalar_lea.vmem %s11, %s447
      %s449 = smul.u32 8, %s27
      %p450 = scmp.lt.s32.totalorder %s26, 1
      %s451 = scalar_select %p450, %s26, 1
      %p452 = scmp.lt.s32.totalorder %s449, 31
      %s453 = scalar_select %p452, %s449, 31
      %s454 = smul.addr %s451, 32
      %s455 = sadd.s32 %s453, %s454
      %s456 = smul.addr %s455, 8
      %s457 = scalar_lea.vmem %s0, %s456
      %s458 = smul.u32 8, %s27
      %p459 = scmp.lt.s32.totalorder %s26, 1
      %s460 = scalar_select %p459, %s26, 1
      %s461 = smul.addr %s460, 4
      %s462 = smul.addr %s461, 4
      %s463 = scalar_lea.vmem %s3, %s462
      %p464 = scmp.lt.s32.totalorder %s26, 1
      %s465 = scalar_select %p464, %s26, 1
      %s466 = smul.addr %s465, 2
      %s467 = scalar_lea.vmem %s4, %s466
      %p468 = scmp.lt.s32.totalorder %s26, 1
      %s469 = scalar_select %p468, %s26, 1
      %s470 = smul.addr %s469, 32
      %s471 = smul.addr %s470, 4
      %s472 = scalar_lea.vmem %s5, %s471
      %s473 = smul.u32 8, %s27
      %p474 = scmp.lt.s32.totalorder %s26, 1
      %s475 = scalar_select %p474, %s26, 1
      %p476 = scmp.lt.s32.totalorder %s473, 31
      %s477 = scalar_select %p476, %s473, 31
      %s478 = smul.addr %s475, 32
      %s479 = sadd.s32 %s477, %s478
      %s480 = smul.addr %s479, 8
      %s481 = scalar_lea.vmem %s11, %s480
      %s482 = smul.u32 8, %s27
      %v484 = vld [vmem:[%s457] sm:$0xff]
      %v485 = vld [vmem:[%s457 + $0x8] sm:$0xff]
      %v486 = vld [vmem:[%s457 + $0x10] sm:$0xff]
      %v487 = vld [vmem:[%s457 + $0x18] sm:$0xff]
      %v488 = vld [vmem:[%s457 + $0x20] sm:$0xff]
      %v489 = vld [vmem:[%s457 + $0x28] sm:$0xff]
      %v490 = vld [vmem:[%s457 + $0x30] sm:$0xff]
      %v491 = vld [vmem:[%s457 + $0x38] sm:$0xff]
      %v492 = vmul.f32 %v484, %v484
      %v493 = vmul.f32 %v485, %v485
      %v494 = vmul.f32 %v486, %v486
      %v495 = vmul.f32 %v487, %v487
      %v496 = vmul.f32 %v488, %v488
      %v497 = vmul.f32 %v489, %v489
      %v498 = vmul.f32 %v490, %v490
      %v499 = vmul.f32 %v491, %v491
      %vm500 = vcmask 64512
      %v501 = vsel %vm500, %v492, 0.0
      %502 = vadd.xlane.f32.xlu0 %v501
      %v503 = vpop.xlane.xlu0 %502
      %v504 = vsel %vm500, %v493, 0.0
      %505 = vadd.xlane.f32.xlu0 %v504
      %v506 = vpop.xlane.xlu0 %505
      %v507 = vsel %vm500, %v494, 0.0
      %508 = vadd.xlane.f32.xlu0 %v507
      %v509 = vpop.xlane.xlu0 %508
      %v510 = vsel %vm500, %v495, 0.0
      %511 = vadd.xlane.f32.xlu0 %v510
      %v512 = vpop.xlane.xlu0 %511
      %v513 = vsel %vm500, %v496, 0.0
      %514 = vadd.xlane.f32.xlu0 %v513
      %v515 = vpop.xlane.xlu0 %514
      %v516 = vsel %vm500, %v497, 0.0
      %517 = vadd.xlane.f32.xlu0 %v516
      %v518 = vpop.xlane.xlu0 %517
      %v519 = vsel %vm500, %v498, 0.0
      %520 = vadd.xlane.f32.xlu0 %v519
      %v521 = vpop.xlane.xlu0 %520
      %v522 = vsel %vm500, %v499, 0.0
      %523 = vadd.xlane.f32.xlu0 %v522
      %v524 = vpop.xlane.xlu0 %523
      %v525 = vrsqrt.pop %v503
      %v526 = vmul.f32 %v503, %v525
      %vm527 = vcmp.eq.f32.partialorder %v503, inf
      %v528 = vsel %vm527, %v503, %v526
      %vm529 = vcmp.eq.f32.partialorder %v503, 0.0
      %v530 = vand.u32 %v503, 2147483648
      %v531 = vsel %vm529, %v530, %v528
      %v532 = vrsqrt.pop %v506
      %v533 = vmul.f32 %v506, %v532
      %vm534 = vcmp.eq.f32.partialorder %v506, inf
      %v535 = vsel %vm534, %v506, %v533
      %vm536 = vcmp.eq.f32.partialorder %v506, 0.0
      %v537 = vand.u32 %v506, 2147483648
      %v538 = vsel %vm536, %v537, %v535
      %v539 = vrsqrt.pop %v509
      %v540 = vmul.f32 %v509, %v539
      %vm541 = vcmp.eq.f32.partialorder %v509, inf
      %v542 = vsel %vm541, %v509, %v540
      %vm543 = vcmp.eq.f32.partialorder %v509, 0.0
      %v544 = vand.u32 %v509, 2147483648
      %v545 = vsel %vm543, %v544, %v542
      %v546 = vrsqrt.pop %v512
      %v547 = vmul.f32 %v512, %v546
      %vm548 = vcmp.eq.f32.partialorder %v512, inf
      %v549 = vsel %vm548, %v512, %v547
      %vm550 = vcmp.eq.f32.partialorder %v512, 0.0
      %v551 = vand.u32 %v512, 2147483648
      %v552 = vsel %vm550, %v551, %v549
      %v553 = vrsqrt.pop %v515
      %v554 = vmul.f32 %v515, %v553
      %vm555 = vcmp.eq.f32.partialorder %v515, inf
      %v556 = vsel %vm555, %v515, %v554
      %vm557 = vcmp.eq.f32.partialorder %v515, 0.0
      %v558 = vand.u32 %v515, 2147483648
      %v559 = vsel %vm557, %v558, %v556
      %v560 = vrsqrt.pop %v518
      %v561 = vmul.f32 %v518, %v560
      %vm562 = vcmp.eq.f32.partialorder %v518, inf
      %v563 = vsel %vm562, %v518, %v561
      %vm564 = vcmp.eq.f32.partialorder %v518, 0.0
      %v565 = vand.u32 %v518, 2147483648
      %v566 = vsel %vm564, %v565, %v563
      %v567 = vrsqrt.pop %v521
      %v568 = vmul.f32 %v521, %v567
      %vm569 = vcmp.eq.f32.partialorder %v521, inf
      %v570 = vsel %vm569, %v521, %v568
      %vm571 = vcmp.eq.f32.partialorder %v521, 0.0
      %v572 = vand.u32 %v521, 2147483648
      %v573 = vsel %vm571, %v572, %v570
      %v574 = vrsqrt.pop %v524
      %v575 = vmul.f32 %v524, %v574
      %vm576 = vcmp.eq.f32.partialorder %v524, inf
      %v577 = vsel %vm576, %v524, %v575
      %vm578 = vcmp.eq.f32.partialorder %v524, 0.0
      %v579 = vand.u32 %v524, 2147483648
      %v580 = vsel %vm578, %v579, %v577
      %v581 = vmax.f32 %v531, 1e-12
      %v582 = vmax.f32 %v538, 1e-12
      %v583 = vmax.f32 %v545, 1e-12
      %v584 = vmax.f32 %v552, 1e-12
      %v585 = vmax.f32 %v559, 1e-12
      %v586 = vmax.f32 %v566, 1e-12
      %v587 = vmax.f32 %v573, 1e-12
      %v588 = vmax.f32 %v580, 1e-12
      %v589 = vrcp.pop %v581
      %v590 = vmul.f32 %v484, %v589
      %v591 = vrcp.pop %v582
      %v592 = vmul.f32 %v485, %v591
      %v593 = vrcp.pop %v583
      %v594 = vmul.f32 %v486, %v593
      %v595 = vrcp.pop %v584
      %v596 = vmul.f32 %v487, %v595
      %v597 = vrcp.pop %v585
      %v598 = vmul.f32 %v488, %v597
      %v599 = vrcp.pop %v586
      %v600 = vmul.f32 %v489, %v599
      %v601 = vrcp.pop %v587
      %v602 = vmul.f32 %v490, %v601
      %v603 = vrcp.pop %v588
      %v604 = vmul.f32 %v491, %v603
      %v605 = vmul.f32 %v590, 2.828427
      %v606 = vmul.f32 %v592, 2.828427
      %v607 = vmul.f32 %v594, 2.828427
      %v608 = vmul.f32 %v596, 2.828427
      %v609 = vmul.f32 %v598, 2.828427
      %v610 = vmul.f32 %v600, 2.828427
      %v611 = vmul.f32 %v602, 2.828427
      %v612 = vmul.f32 %v604, 2.828427
      %v613 = vld [vmem:[%s1] sm:$0x1]
      %v615 = vlaneseq
      %v616 = vshrl.u32 %v615, 7
      %v617 = vsub.s32 0, %v616
      %v618 = vrot.slane %v613, %v617
      %v620 = vmul.f32 %v605, %v618
      %v621 = vmul.f32 %v606, %v618
      %v622 = vmul.f32 %v607, %v618
      %v623 = vmul.f32 %v608, %v618
      %v624 = vmul.f32 %v609, %v618
      %v625 = vmul.f32 %v610, %v618
      %v626 = vmul.f32 %v611, %v618
      %v627 = vmul.f32 %v612, %v618
      %v628 = vpack.c.bf16 %v621, %v620
      %v629 = vpack.c.bf16 %v623, %v622
      %v630 = vpack.c.bf16 %v625, %v624
      %v631 = vpack.c.bf16 %v627, %v626
      %v632 = vld [vmem:[%s2] sm:$0xf]
      %v634 = vsel %vm500, %v628, 0
      %v637 = vsel %vm500, %v629, 0
      %v640 = vsel %vm500, %v630, 0
      %v643 = vsel %vm500, %v631, 0
      %vm645 = vcmask 1043456
      %v647 = vsel %vm645, %v632, 0
      %649 = vmatprep.subr.bf16.mxu0 0
      %650 = vmatpush1.bf16.msra.mxu0 %v647
      %651 = vmatprep.subr.bf16.mxu0 0
      %652 = vmatpush1.bf16.msra.mxu0 0
      %653 = vmatprep.subr.bf16.mxu0 0
      %654 = vmatpush1.bf16.msra.mxu0 0
      %655 = vmatprep.subr.bf16.mxu0 0
      %656 = vmatpush1.bf16.msra.mxu0 0
      %657 = vmatprep.subr.bf16.mxu0 0
      %658 = vmatpush1.bf16.msra.mxu0 0
      %659 = vmatprep.subr.bf16.mxu0 0
      %660 = vmatpush1.bf16.msra.mxu0 0
      %661 = vmatprep.subr.bf16.mxu0 0
      %662 = vmatpush1.bf16.msra.mxu0 0
      %663 = vmatprep.subr.bf16.mxu0 0
      %664 = vmatpush1.bf16.msra.mxu0 0
      %665 = vmatprep.subr.bf16.mxu0 0
      %666 = vmatpush1.bf16.msra.mxu0 0
      %667 = vmatprep.subr.bf16.mxu0 0
      %668 = vmatpush1.bf16.msra.mxu0 0
      %669 = vmatprep.subr.bf16.mxu0 0
      %670 = vmatpush1.bf16.msra.mxu0 0
      %671 = vmatprep.subr.bf16.mxu0 0
      %672 = vmatpush1.bf16.msra.mxu0 0
      %673 = vmatprep.subr.bf16.mxu0 0
      %674 = vmatpush1.bf16.msra.mxu0 0
      %675 = vmatprep.subr.bf16.mxu0 0
      %676 = vmatpush1.bf16.msra.mxu0 0
      %677 = vmatprep.subr.bf16.mxu0 0
      %678 = vmatpush1.bf16.msra.mxu0 0
      %679 = vmatprep.subr.bf16.mxu0 0
      %680 = vmatpush1.bf16.msra.mxu0 0
      %681 = vmatprep.mubr.bf16.mxu0 0
      %682 = vmatmul.mubr.bf16.gmra.mrb[0].mxu0 %v634
      %v683 = vpop.f32.mrb[0].mxu0
      %v684 = vadd.f32 0.0, %v683
      %v685 = vpop.f32.mrb[0].mxu0
      %v686 = vpop.f32.mrb[0].mxu0
      %v687 = vadd.f32 0.0, %v686
      %v688 = vpop.f32.mrb[0].mxu0
      %689 = vmatprep.mubr.bf16.mxu0 0
      %690 = vmatmul.mubr.bf16.gmra.mrb[0].mxu0 %v637
      %v691 = vpop.f32.mrb[0].mxu0
      %v692 = vadd.f32 0.0, %v691
      %v693 = vpop.f32.mrb[0].mxu0
      %v694 = vpop.f32.mrb[0].mxu0
      %v695 = vadd.f32 0.0, %v694
      %v696 = vpop.f32.mrb[0].mxu0
      %697 = vmatprep.mubr.bf16.mxu0 0
      %698 = vmatmul.mubr.bf16.gmra.mrb[0].mxu0 %v640
      %v699 = vpop.f32.mrb[0].mxu0
      %v700 = vadd.f32 0.0, %v699
      %v701 = vpop.f32.mrb[0].mxu0
      %v702 = vpop.f32.mrb[0].mxu0
      %v703 = vadd.f32 0.0, %v702
      %v704 = vpop.f32.mrb[0].mxu0
      %705 = vmatprep.mubr.bf16.mxu0 0
      %706 = vmatmul.mubr.bf16.gmra.mrb[0].mxu0 %v643
      %v707 = vpop.f32.mrb[0].mxu0
      %v708 = vadd.f32 0.0, %v707
      %v709 = vpop.f32.mrb[0].mxu0
      %v710 = vpop.f32.mrb[0].mxu0
      %v711 = vadd.f32 0.0, %v710
      %v712 = vpop.f32.mrb[0].mxu0
      %713 = vdwg.mxu0
      %v714 = vmul.f32 %v684, %v684
      %v715 = vmul.f32 %v687, %v687
      %v716 = vmul.f32 %v692, %v692
      %v717 = vmul.f32 %v695, %v695
      %v718 = vmul.f32 %v700, %v700
      %v719 = vmul.f32 %v703, %v703
      %v720 = vmul.f32 %v708, %v708
      %v721 = vmul.f32 %v711, %v711
      %vm722 = vcmask 130048
      %v723 = vsel %vm722, %v714, 0.0
      %724 = vadd.xlane.f32.xlu0 %v723
      %v725 = vpop.xlane.xlu0 %724
      %v726 = vsel %vm722, %v715, 0.0
      %727 = vadd.xlane.f32.xlu0 %v726
      %v728 = vpop.xlane.xlu0 %727
      %v729 = vsel %vm722, %v716, 0.0
      %730 = vadd.xlane.f32.xlu0 %v729
      %v731 = vpop.xlane.xlu0 %730
      %v732 = vsel %vm722, %v717, 0.0
      %733 = vadd.xlane.f32.xlu0 %v732
      %v734 = vpop.xlane.xlu0 %733
      %v735 = vsel %vm722, %v718, 0.0
      %736 = vadd.xlane.f32.xlu0 %v735
      %v737 = vpop.xlane.xlu0 %736
      %v738 = vsel %vm722, %v719, 0.0
      %739 = vadd.xlane.f32.xlu0 %v738
      %v740 = vpop.xlane.xlu0 %739
      %v741 = vsel %vm722, %v720, 0.0
      %742 = vadd.xlane.f32.xlu0 %v741
      %v743 = vpop.xlane.xlu0 %742
      %v744 = vsel %vm722, %v721, 0.0
      %745 = vadd.xlane.f32.xlu0 %v744
      %v746 = vpop.xlane.xlu0 %745
      %v747 = vpack.c.bf16 %v687, %v684
      %v748 = vpack.c.bf16 %v695, %v692
      %v749 = vpack.c.bf16 %v703, %v700
      %v750 = vpack.c.bf16 %v711, %v708
      %v751 = vld [vmem:[%s463] sm:$0xf]
      %v752 = vld [vmem:[%s463 + $0x4] sm:$0xf]
      %v755 = vunpack.c.l.b16 %v751
      %v756 = vunpack.c.l.b16 %v752
      %v757 = vpack.c.b16 %v756, %v755
      %v760 = vsel %vm722, %v747, 0
      %v763 = vsel %vm722, %v748, 0
      %v766 = vsel %vm722, %v749, 0
      %v769 = vsel %vm722, %v750, 0
      %771 = vmatprep.subr.bf16.mxu0 0
      %772 = vmatpush1.bf16.msra.mxu0 %v757
      %773 = vmatprep.subr.bf16.mxu0 0
      %774 = vmatpush1.bf16.msra.mxu0 0
      %775 = vmatprep.subr.bf16.mxu0 0
      %776 = vmatpush1.bf16.msra.mxu0 0
      %777 = vmatprep.subr.bf16.mxu0 0
      %778 = vmatpush1.bf16.msra.mxu0 0
      %779 = vmatprep.subr.bf16.mxu0 0
      %780 = vmatpush1.bf16.msra.mxu0 0
      %781 = vmatprep.subr.bf16.mxu0 0
      %782 = vmatpush1.bf16.msra.mxu0 0
      %783 = vmatprep.subr.bf16.mxu0 0
      %784 = vmatpush1.bf16.msra.mxu0 0
      %785 = vmatprep.subr.bf16.mxu0 0
      %786 = vmatpush1.bf16.msra.mxu0 0
      %787 = vmatprep.subr.bf16.mxu0 0
      %788 = vmatpush1.bf16.msra.mxu0 0
      %789 = vmatprep.subr.bf16.mxu0 0
      %790 = vmatpush1.bf16.msra.mxu0 0
      %791 = vmatprep.subr.bf16.mxu0 0
      %792 = vmatpush1.bf16.msra.mxu0 0
      %793 = vmatprep.subr.bf16.mxu0 0
      %794 = vmatpush1.bf16.msra.mxu0 0
      %795 = vmatprep.subr.bf16.mxu0 0
      %796 = vmatpush1.bf16.msra.mxu0 0
      %797 = vmatprep.subr.bf16.mxu0 0
      %798 = vmatpush1.bf16.msra.mxu0 0
      %799 = vmatprep.subr.bf16.mxu0 0
      %800 = vmatpush1.bf16.msra.mxu0 0
      %801 = vmatprep.subr.bf16.mxu0 0
      %802 = vmatpush1.bf16.msra.mxu0 0
      %803 = vmatprep.mubr.bf16.mxu0 0
      %804 = vmatmul.mubr.bf16.gmra.mrb[0].mxu0 %v760
      %v805 = vpop.f32.mrb[0].mxu0
      %v806 = vadd.f32 0.0, %v805
      %v807 = vpop.f32.mrb[0].mxu0
      %v808 = vpop.f32.mrb[0].mxu0
      %v809 = vadd.f32 0.0, %v808
      %v810 = vpop.f32.mrb[0].mxu0
      %811 = vmatprep.mubr.bf16.mxu0 0
      %812 = vmatmul.mubr.bf16.gmra.mrb[0].mxu0 %v763
      %v813 = vpop.f32.mrb[0].mxu0
      %v814 = vadd.f32 0.0, %v813
      %v815 = vpop.f32.mrb[0].mxu0
      %v816 = vpop.f32.mrb[0].mxu0
      %v817 = vadd.f32 0.0, %v816
      %v818 = vpop.f32.mrb[0].mxu0
      %819 = vmatprep.mubr.bf16.mxu0 0
      %820 = vmatmul.mubr.bf16.gmra.mrb[0].mxu0 %v766
      %v821 = vpop.f32.mrb[0].mxu0
      %v822 = vadd.f32 0.0, %v821
      %v823 = vpop.f32.mrb[0].mxu0
      %v824 = vpop.f32.mrb[0].mxu0
      %v825 = vadd.f32 0.0, %v824
      %v826 = vpop.f32.mrb[0].mxu0
      %827 = vmatprep.mubr.bf16.mxu0 0
      %828 = vmatmul.mubr.bf16.gmra.mrb[0].mxu0 %v769
      %v829 = vpop.f32.mrb[0].mxu0
      %v830 = vadd.f32 0.0, %v829
      %v831 = vpop.f32.mrb[0].mxu0
      %v832 = vpop.f32.mrb[0].mxu0
      %v833 = vadd.f32 0.0, %v832
      %v834 = vpop.f32.mrb[0].mxu0
      %835 = vdwg.mxu0
      %v836 = vld [vmem:[%s467] sm:$0x1]
      %v838 = vlaneseq
      %v839 = vshrl.u32 %v838, 7
      %v840 = vsub.s32 0, %v839
      %v841 = vrot.slane %v836, %v840
      %v843 = vadd.f32 %v725, %v841
      %v844 = vadd.f32 %v728, %v841
      %v845 = vadd.f32 %v731, %v841
      %v846 = vadd.f32 %v734, %v841
      %v847 = vadd.f32 %v737, %v841
      %v848 = vadd.f32 %v740, %v841
      %v849 = vadd.f32 %v743, %v841
      %v850 = vadd.f32 %v746, %v841
      %v851 = vmul.f32 %v806, 2.0
      %v852 = vmul.f32 %v809, 2.0
      %v853 = vmul.f32 %v814, 2.0
      %v854 = vmul.f32 %v817, 2.0
      %v855 = vmul.f32 %v822, 2.0
      %v856 = vmul.f32 %v825, 2.0
      %v857 = vmul.f32 %v830, 2.0
      %v858 = vmul.f32 %v833, 2.0
      %v859 = vsub.f32 %v843, %v851
      %v860 = vsub.f32 %v844, %v852
      %v861 = vsub.f32 %v845, %v853
      %v862 = vsub.f32 %v846, %v854
      %v863 = vsub.f32 %v847, %v855
      %v864 = vsub.f32 %v848, %v856
      %v865 = vsub.f32 %v849, %v857
      %v866 = vsub.f32 %v850, %v858
      %v867 = vmax.f32 %v859, 0.0
      %v868 = vmax.f32 %v860, 0.0
      %v869 = vmax.f32 %v861, 0.0
      %v870 = vmax.f32 %v862, 0.0
      %v871 = vmax.f32 %v863, 0.0
      %v872 = vmax.f32 %v864, 0.0
      %v873 = vmax.f32 %v865, 0.0
      %v874 = vmax.f32 %v866, 0.0
      %v875 = vrsqrt.pop %v867
      %v876 = vmul.f32 %v867, %v875
      %vm877 = vcmp.eq.f32.partialorder %v867, inf
      %v878 = vsel %vm877, %v867, %v876
      %vm879 = vcmp.eq.f32.partialorder %v867, 0.0
      %v880 = vand.u32 %v867, 2147483648
      %v881 = vsel %vm879, %v880, %v878
      %v882 = vrsqrt.pop %v868
      %v883 = vmul.f32 %v868, %v882
      %vm884 = vcmp.eq.f32.partialorder %v868, inf
      %v885 = vsel %vm884, %v868, %v883
      %vm886 = vcmp.eq.f32.partialorder %v868, 0.0
      %v887 = vand.u32 %v868, 2147483648
      %v888 = vsel %vm886, %v887, %v885
      %v889 = vrsqrt.pop %v869
      %v890 = vmul.f32 %v869, %v889
      %vm891 = vcmp.eq.f32.partialorder %v869, inf
      %v892 = vsel %vm891, %v869, %v890
      %vm893 = vcmp.eq.f32.partialorder %v869, 0.0
      %v894 = vand.u32 %v869, 2147483648
      %v895 = vsel %vm893, %v894, %v892
      %v896 = vrsqrt.pop %v870
      %v897 = vmul.f32 %v870, %v896
      %vm898 = vcmp.eq.f32.partialorder %v870, inf
      %v899 = vsel %vm898, %v870, %v897
      %vm900 = vcmp.eq.f32.partialorder %v870, 0.0
      %v901 = vand.u32 %v870, 2147483648
      %v902 = vsel %vm900, %v901, %v899
      %v903 = vrsqrt.pop %v871
      %v904 = vmul.f32 %v871, %v903
      %vm905 = vcmp.eq.f32.partialorder %v871, inf
      %v906 = vsel %vm905, %v871, %v904
      %vm907 = vcmp.eq.f32.partialorder %v871, 0.0
      %v908 = vand.u32 %v871, 2147483648
      %v909 = vsel %vm907, %v908, %v906
      %v910 = vrsqrt.pop %v872
      %v911 = vmul.f32 %v872, %v910
      %vm912 = vcmp.eq.f32.partialorder %v872, inf
      %v913 = vsel %vm912, %v872, %v911
      %vm914 = vcmp.eq.f32.partialorder %v872, 0.0
      %v915 = vand.u32 %v872, 2147483648
      %v916 = vsel %vm914, %v915, %v913
      %v917 = vrsqrt.pop %v873
      %v918 = vmul.f32 %v873, %v917
      %vm919 = vcmp.eq.f32.partialorder %v873, inf
      %v920 = vsel %vm919, %v873, %v918
      %vm921 = vcmp.eq.f32.partialorder %v873, 0.0
      %v922 = vand.u32 %v873, 2147483648
      %v923 = vsel %vm921, %v922, %v920
      %v924 = vrsqrt.pop %v874
      %v925 = vmul.f32 %v874, %v924
      %vm926 = vcmp.eq.f32.partialorder %v874, inf
      %v927 = vsel %vm926, %v874, %v925
      %vm928 = vcmp.eq.f32.partialorder %v874, 0.0
      %v929 = vand.u32 %v874, 2147483648
      %v930 = vsel %vm928, %v929, %v927
      %v931 = vsub.f32 0.0, %v881
      %v932 = vsub.f32 0.0, %v888
      %v933 = vsub.f32 0.0, %v895
      %v934 = vsub.f32 0.0, %v902
      %v935 = vsub.f32 0.0, %v909
      %v936 = vsub.f32 0.0, %v916
      %v937 = vsub.f32 0.0, %v923
      %v938 = vsub.f32 0.0, %v930
      %v939 = vmul.f32 %v931, 0.25
      %v940 = vmul.f32 %v932, 0.25
      %v941 = vmul.f32 %v933, 0.25
      %v942 = vmul.f32 %v934, 0.25
      %v943 = vmul.f32 %v935, 0.25
      %v944 = vmul.f32 %v936, 0.25
      %v945 = vmul.f32 %v937, 0.25
      %v946 = vmul.f32 %v938, 0.25
      %947 = vmax.xlane.f32.xlu0 %v939
      %v948 = vpop.xlane.xlu0 %947
      %949 = vmax.xlane.f32.xlu0 %v940
      %v950 = vpop.xlane.xlu0 %949
      %951 = vmax.xlane.f32.xlu0 %v941
      %v952 = vpop.xlane.xlu0 %951
      %953 = vmax.xlane.f32.xlu0 %v942
      %v954 = vpop.xlane.xlu0 %953
      %955 = vmax.xlane.f32.xlu0 %v943
      %v956 = vpop.xlane.xlu0 %955
      %957 = vmax.xlane.f32.xlu0 %v944
      %v958 = vpop.xlane.xlu0 %957
      %959 = vmax.xlane.f32.xlu0 %v945
      %v960 = vpop.xlane.xlu0 %959
      %961 = vmax.xlane.f32.xlu0 %v946
      %v962 = vpop.xlane.xlu0 %961
      %v963 = vsub.f32 %v939, %v948
      %v964 = vsub.f32 %v940, %v950
      %v965 = vsub.f32 %v941, %v952
      %v966 = vsub.f32 %v942, %v954
      %v967 = vsub.f32 %v943, %v956
      %v968 = vsub.f32 %v944, %v958
      %v969 = vsub.f32 %v945, %v960
      %v970 = vsub.f32 %v946, %v962
      %v971 = vmul.f32 %v963, 1.442695
      %v972 = vpow.pop %v971
      %v973 = vmul.f32 %v964, 1.442695
      %v974 = vpow.pop %v973
      %v975 = vmul.f32 %v965, 1.442695
      %v976 = vpow.pop %v975
      %v977 = vmul.f32 %v966, 1.442695
      %v978 = vpow.pop %v977
      %v979 = vmul.f32 %v967, 1.442695
      %v980 = vpow.pop %v979
      %v981 = vmul.f32 %v968, 1.442695
      %v982 = vpow.pop %v981
      %v983 = vmul.f32 %v969, 1.442695
      %v984 = vpow.pop %v983
      %v985 = vmul.f32 %v970, 1.442695
      %v986 = vpow.pop %v985
      %987 = vadd.xlane.f32.xlu0 %v972
      %v988 = vpop.xlane.xlu0 %987
      %989 = vadd.xlane.f32.xlu0 %v974
      %v990 = vpop.xlane.xlu0 %989
      %991 = vadd.xlane.f32.xlu0 %v976
      %v992 = vpop.xlane.xlu0 %991
      %993 = vadd.xlane.f32.xlu0 %v978
      %v994 = vpop.xlane.xlu0 %993
      %995 = vadd.xlane.f32.xlu0 %v980
      %v996 = vpop.xlane.xlu0 %995
      %997 = vadd.xlane.f32.xlu0 %v982
      %v998 = vpop.xlane.xlu0 %997
      %999 = vadd.xlane.f32.xlu0 %v984
      %v1000 = vpop.xlane.xlu0 %999
      %1001 = vadd.xlane.f32.xlu0 %v986
      %v1002 = vpop.xlane.xlu0 %1001
      %v1003 = vrcp.pop %v988
      %v1004 = vrcp.pop %v990
      %v1005 = vrcp.pop %v992
      %v1006 = vrcp.pop %v994
      %v1007 = vrcp.pop %v996
      %v1008 = vrcp.pop %v998
      %v1009 = vrcp.pop %v1000
      %v1010 = vrcp.pop %v1002
      %v1011 = vmul.f32 %v972, %v1003
      %v1012 = vmul.f32 %v974, %v1004
      %v1013 = vmul.f32 %v976, %v1005
      %v1014 = vmul.f32 %v978, %v1006
      %v1015 = vmul.f32 %v980, %v1007
      %v1016 = vmul.f32 %v982, %v1008
      %v1017 = vmul.f32 %v984, %v1009
      %v1018 = vmul.f32 %v986, %v1010
      %v1019 = vpack.c.bf16 %v1012, %v1011
      %v1020 = vpack.c.bf16 %v1014, %v1013
      %v1021 = vpack.c.bf16 %v1016, %v1015
      %v1022 = vpack.c.bf16 %v1018, %v1017
      %1023 = vst [vmem:[#allocation2] sm:$0xff] %v1019
      %1024 = vst [vmem:[#allocation2 + $0x10] sm:$0xff] %v1020
      %1025 = vst [vmem:[#allocation2 + $0x20] sm:$0xff] %v1021
      %1026 = vst [vmem:[#allocation2 + $0x30] sm:$0xff] %v1022
      %1035 = vrot.lane.b32.xlu0 %v714, 112
      %v1036 = vpop.permute.xlu0 %1035
      %1037 = vrot.lane.b32.xlu0 %v715, 112
      %v1038 = vpop.permute.xlu0 %1037
      %1039 = vrot.lane.b32.xlu0 %v716, 112
      %v1040 = vpop.permute.xlu0 %1039
      %1041 = vrot.lane.b32.xlu0 %v717, 112
      %v1042 = vpop.permute.xlu0 %1041
      %1043 = vrot.lane.b32.xlu0 %v718, 112
      %v1044 = vpop.permute.xlu0 %1043
      %1045 = vrot.lane.b32.xlu0 %v719, 112
      %v1046 = vpop.permute.xlu0 %1045
      %1047 = vrot.lane.b32.xlu0 %v720, 112
      %v1048 = vpop.permute.xlu0 %1047
      %1049 = vrot.lane.b32.xlu0 %v721, 112
      %v1050 = vpop.permute.xlu0 %1049
      %v1059 = vsel %vm722, %v1036, 0.0
      %1060 = vadd.xlane.f32.xlu0 %v1059
      %v1061 = vpop.xlane.xlu0 %1060
      %v1062 = vsel %vm722, %v1038, 0.0
      %1063 = vadd.xlane.f32.xlu0 %v1062
      %v1064 = vpop.xlane.xlu0 %1063
      %v1065 = vsel %vm722, %v1040, 0.0
      %1066 = vadd.xlane.f32.xlu0 %v1065
      %v1067 = vpop.xlane.xlu0 %1066
      %v1068 = vsel %vm722, %v1042, 0.0
      %1069 = vadd.xlane.f32.xlu0 %v1068
      %v1070 = vpop.xlane.xlu0 %1069
      %v1071 = vsel %vm722, %v1044, 0.0
      %1072 = vadd.xlane.f32.xlu0 %v1071
      %v1073 = vpop.xlane.xlu0 %1072
      %v1074 = vsel %vm722, %v1046, 0.0
      %1075 = vadd.xlane.f32.xlu0 %v1074
      %v1076 = vpop.xlane.xlu0 %1075
      %v1077 = vsel %vm722, %v1048, 0.0
      %1078 = vadd.xlane.f32.xlu0 %v1077
      %v1079 = vpop.xlane.xlu0 %1078
      %v1080 = vsel %vm722, %v1050, 0.0
      %1081 = vadd.xlane.f32.xlu0 %v1080
      %v1082 = vpop.xlane.xlu0 %1081
      %s1083 = scalar_lea.vmem %s463, 8
      %v1084 = vld [vmem:[%s1083] sm:$0xf]
      %v1085 = vld [vmem:[%s1083 + $0x4] sm:$0xf]
      %1090 = vrot.lane.b32.xlu0 %v747, 112
      %v1091 = vpop.permute.xlu0 %1090
      %1092 = vrot.lane.b32.xlu0 %v748, 112
      %v1093 = vpop.permute.xlu0 %1092
      %1094 = vrot.lane.b32.xlu0 %v749, 112
      %v1095 = vpop.permute.xlu0 %1094
      %1096 = vrot.lane.b32.xlu0 %v750, 112
      %v1097 = vpop.permute.xlu0 %1096
      %v1100 = vunpack.c.l.b16 %v1084
      %v1101 = vunpack.c.l.b16 %v1085
      %v1102 = vpack.c.b16 %v1101, %v1100
      %v1105 = vsel %vm722, %v1091, 0
      %v1108 = vsel %vm722, %v1093, 0
      %v1111 = vsel %vm722, %v1095, 0
      %v1114 = vsel %vm722, %v1097, 0
      %1116 = vmatprep.subr.bf16.mxu0 0
      %1117 = vmatpush1.bf16.msra.mxu0 %v1102
      %1118 = vmatprep.subr.bf16.mxu0 0
      %1119 = vmatpush1.bf16.msra.mxu0 0
      %1120 = vmatprep.subr.bf16.mxu0 0
      %1121 = vmatpush1.bf16.msra.mxu0 0
      %1122 = vmatprep.subr.bf16.mxu0 0
      %1123 = vmatpush1.bf16.msra.mxu0 0
      %1124 = vmatprep.subr.bf16.mxu0 0
      %1125 = vmatpush1.bf16.msra.mxu0 0
      %1126 = vmatprep.subr.bf16.mxu0 0
      %1127 = vmatpush1.bf16.msra.mxu0 0
      %1128 = vmatprep.subr.bf16.mxu0 0
      %1129 = vmatpush1.bf16.msra.mxu0 0
      %1130 = vmatprep.subr.bf16.mxu0 0
      %1131 = vmatpush1.bf16.msra.mxu0 0
      %1132 = vmatprep.subr.bf16.mxu0 0
      %1133 = vmatpush1.bf16.msra.mxu0 0
      %1134 = vmatprep.subr.bf16.mxu0 0
      %1135 = vmatpush1.bf16.msra.mxu0 0
      %1136 = vmatprep.subr.bf16.mxu0 0
      %1137 = vmatpush1.bf16.msra.mxu0 0
      %1138 = vmatprep.subr.bf16.mxu0 0
      %1139 = vmatpush1.bf16.msra.mxu0 0
      %1140 = vmatprep.subr.bf16.mxu0 0
      %1141 = vmatpush1.bf16.msra.mxu0 0
      %1142 = vmatprep.subr.bf16.mxu0 0
      %1143 = vmatpush1.bf16.msra.mxu0 0
      %1144 = vmatprep.subr.bf16.mxu0 0
      %1145 = vmatpush1.bf16.msra.mxu0 0
      %1146 = vmatprep.subr.bf16.mxu0 0
      %1147 = vmatpush1.bf16.msra.mxu0 0
      %1148 = vmatprep.mubr.bf16.mxu0 0
      %1149 = vmatmul.mubr.bf16.gmra.mrb[0].mxu0 %v1105
      %v1150 = vpop.f32.mrb[0].mxu0
      %v1151 = vadd.f32 0.0, %v1150
      %v1152 = vpop.f32.mrb[0].mxu0
      %v1153 = vpop.f32.mrb[0].mxu0
      %v1154 = vadd.f32 0.0, %v1153
      %v1155 = vpop.f32.mrb[0].mxu0
      %1156 = vmatprep.mubr.bf16.mxu0 0
      %1157 = vmatmul.mubr.bf16.gmra.mrb[0].mxu0 %v1108
      %v1158 = vpop.f32.mrb[0].mxu0
      %v1159 = vadd.f32 0.0, %v1158
      %v1160 = vpop.f32.mrb[0].mxu0
      %v1161 = vpop.f32.mrb[0].mxu0
      %v1162 = vadd.f32 0.0, %v1161
      %v1163 = vpop.f32.mrb[0].mxu0
      %1164 = vmatprep.mubr.bf16.mxu0 0
      %1165 = vmatmul.mubr.bf16.gmra.mrb[0].mxu0 %v1111
      %v1166 = vpop.f32.mrb[0].mxu0
      %v1167 = vadd.f32 0.0, %v1166
      %v1168 = vpop.f32.mrb[0].mxu0
      %v1169 = vpop.f32.mrb[0].mxu0
      %v1170 = vadd.f32 0.0, %v1169
      %v1171 = vpop.f32.mrb[0].mxu0
      %1172 = vmatprep.mubr.bf16.mxu0 0
      %1173 = vmatmul.mubr.bf16.gmra.mrb[0].mxu0 %v1114
      %v1174 = vpop.f32.mrb[0].mxu0
      %v1175 = vadd.f32 0.0, %v1174
      %v1176 = vpop.f32.mrb[0].mxu0
      %v1177 = vpop.f32.mrb[0].mxu0
      %v1178 = vadd.f32 0.0, %v1177
      %v1179 = vpop.f32.mrb[0].mxu0
      %1180 = vdwg.mxu0
      %s1181 = scalar_lea.vmem %s467, 1
      %v1182 = vld [vmem:[%s1181] sm:$0x1]
      %v1184 = vlaneseq
      %v1185 = vshrl.u32 %v1184, 7
      %v1186 = vsub.s32 0, %v1185
      %v1187 = vrot.slane %v1182, %v1186
      %v1189 = vadd.f32 %v1061, %v1187
      %v1190 = vadd.f32 %v1064, %v1187
      %v1191 = vadd.f32 %v1067, %v1187
      %v1192 = vadd.f32 %v1070, %v1187
      %v1193 = vadd.f32 %v1073, %v1187
      %v1194 = vadd.f32 %v1076, %v1187
      %v1195 = vadd.f32 %v1079, %v1187
      %v1196 = vadd.f32 %v1082, %v1187
      %v1197 = vmul.f32 %v1151, 2.0
      %v1198 = vmul.f32 %v1154, 2.0
      %v1199 = vmul.f32 %v1159, 2.0
      %v1200 = vmul.f32 %v1162, 2.0
      %v1201 = vmul.f32 %v1167, 2.0
      %v1202 = vmul.f32 %v1170, 2.0
      %v1203 = vmul.f32 %v1175, 2.0
      %v1204 = vmul.f32 %v1178, 2.0
      %v1205 = vsub.f32 %v1189, %v1197
      %v1206 = vsub.f32 %v1190, %v1198
      %v1207 = vsub.f32 %v1191, %v1199
      %v1208 = vsub.f32 %v1192, %v1200
      %v1209 = vsub.f32 %v1193, %v1201
      %v1210 = vsub.f32 %v1194, %v1202
      %v1211 = vsub.f32 %v1195, %v1203
      %v1212 = vsub.f32 %v1196, %v1204
      %v1213 = vmax.f32 %v1205, 0.0
      %v1214 = vmax.f32 %v1206, 0.0
      %v1215 = vmax.f32 %v1207, 0.0
      %v1216 = vmax.f32 %v1208, 0.0
      %v1217 = vmax.f32 %v1209, 0.0
      %v1218 = vmax.f32 %v1210, 0.0
      %v1219 = vmax.f32 %v1211, 0.0
      %v1220 = vmax.f32 %v1212, 0.0
      %v1221 = vrsqrt.pop %v1213
      %v1222 = vmul.f32 %v1213, %v1221
      %vm1223 = vcmp.eq.f32.partialorder %v1213, inf
      %v1224 = vsel %vm1223, %v1213, %v1222
      %vm1225 = vcmp.eq.f32.partialorder %v1213, 0.0
      %v1226 = vand.u32 %v1213, 2147483648
      %v1227 = vsel %vm1225, %v1226, %v1224
      %v1228 = vrsqrt.pop %v1214
      %v1229 = vmul.f32 %v1214, %v1228
      %vm1230 = vcmp.eq.f32.partialorder %v1214, inf
      %v1231 = vsel %vm1230, %v1214, %v1229
      %vm1232 = vcmp.eq.f32.partialorder %v1214, 0.0
      %v1233 = vand.u32 %v1214, 2147483648
      %v1234 = vsel %vm1232, %v1233, %v1231
      %v1235 = vrsqrt.pop %v1215
      %v1236 = vmul.f32 %v1215, %v1235
      %vm1237 = vcmp.eq.f32.partialorder %v1215, inf
      %v1238 = vsel %vm1237, %v1215, %v1236
      %vm1239 = vcmp.eq.f32.partialorder %v1215, 0.0
      %v1240 = vand.u32 %v1215, 2147483648
      %v1241 = vsel %vm1239, %v1240, %v1238
      %v1242 = vrsqrt.pop %v1216
      %v1243 = vmul.f32 %v1216, %v1242
      %vm1244 = vcmp.eq.f32.partialorder %v1216, inf
      %v1245 = vsel %vm1244, %v1216, %v1243
      %vm1246 = vcmp.eq.f32.partialorder %v1216, 0.0
      %v1247 = vand.u32 %v1216, 2147483648
      %v1248 = vsel %vm1246, %v1247, %v1245
      %v1249 = vrsqrt.pop %v1217
      %v1250 = vmul.f32 %v1217, %v1249
      %vm1251 = vcmp.eq.f32.partialorder %v1217, inf
      %v1252 = vsel %vm1251, %v1217, %v1250
      %vm1253 = vcmp.eq.f32.partialorder %v1217, 0.0
      %v1254 = vand.u32 %v1217, 2147483648
      %v1255 = vsel %vm1253, %v1254, %v1252
      %v1256 = vrsqrt.pop %v1218
      %v1257 = vmul.f32 %v1218, %v1256
      %vm1258 = vcmp.eq.f32.partialorder %v1218, inf
      %v1259 = vsel %vm1258, %v1218, %v1257
      %vm1260 = vcmp.eq.f32.partialorder %v1218, 0.0
      %v1261 = vand.u32 %v1218, 2147483648
      %v1262 = vsel %vm1260, %v1261, %v1259
      %v1263 = vrsqrt.pop %v1219
      %v1264 = vmul.f32 %v1219, %v1263
      %vm1265 = vcmp.eq.f32.partialorder %v1219, inf
      %v1266 = vsel %vm1265, %v1219, %v1264
      %vm1267 = vcmp.eq.f32.partialorder %v1219, 0.0
      %v1268 = vand.u32 %v1219, 2147483648
      %v1269 = vsel %vm1267, %v1268, %v1266
      %v1270 = vrsqrt.pop %v1220
      %v1271 = vmul.f32 %v1220, %v1270
      %vm1272 = vcmp.eq.f32.partialorder %v1220, inf
      %v1273 = vsel %vm1272, %v1220, %v1271
      %vm1274 = vcmp.eq.f32.partialorder %v1220, 0.0
      %v1275 = vand.u32 %v1220, 2147483648
      %v1276 = vsel %vm1274, %v1275, %v1273
      %v1277 = vsub.f32 0.0, %v1227
      %v1278 = vsub.f32 0.0, %v1234
      %v1279 = vsub.f32 0.0, %v1241
      %v1280 = vsub.f32 0.0, %v1248
      %v1281 = vsub.f32 0.0, %v1255
      %v1282 = vsub.f32 0.0, %v1262
      %v1283 = vsub.f32 0.0, %v1269
      %v1284 = vsub.f32 0.0, %v1276
      %v1285 = vmul.f32 %v1277, 0.25
      %v1286 = vmul.f32 %v1278, 0.25
      %v1287 = vmul.f32 %v1279, 0.25
      %v1288 = vmul.f32 %v1280, 0.25
      %v1289 = vmul.f32 %v1281, 0.25
      %v1290 = vmul.f32 %v1282, 0.25
      %v1291 = vmul.f32 %v1283, 0.25
      %v1292 = vmul.f32 %v1284, 0.25
      %1293 = vmax.xlane.f32.xlu0 %v1285
      %v1294 = vpop.xlane.xlu0 %1293
      %1295 = vmax.xlane.f32.xlu0 %v1286
      %v1296 = vpop.xlane.xlu0 %1295
      %1297 = vmax.xlane.f32.xlu0 %v1287
      %v1298 = vpop.xlane.xlu0 %1297
      %1299 = vmax.xlane.f32.xlu0 %v1288
      %v1300 = vpop.xlane.xlu0 %1299
      %1301 = vmax.xlane.f32.xlu0 %v1289
      %v1302 = vpop.xlane.xlu0 %1301
      %1303 = vmax.xlane.f32.xlu0 %v1290
      %v1304 = vpop.xlane.xlu0 %1303
      %1305 = vmax.xlane.f32.xlu0 %v1291
      %v1306 = vpop.xlane.xlu0 %1305
      %1307 = vmax.xlane.f32.xlu0 %v1292
      %v1308 = vpop.xlane.xlu0 %1307
      %v1309 = vsub.f32 %v1285, %v1294
      %v1310 = vsub.f32 %v1286, %v1296
      %v1311 = vsub.f32 %v1287, %v1298
      %v1312 = vsub.f32 %v1288, %v1300
      %v1313 = vsub.f32 %v1289, %v1302
      %v1314 = vsub.f32 %v1290, %v1304
      %v1315 = vsub.f32 %v1291, %v1306
      %v1316 = vsub.f32 %v1292, %v1308
      %v1317 = vmul.f32 %v1309, 1.442695
      %v1318 = vpow.pop %v1317
      %v1319 = vmul.f32 %v1310, 1.442695
      %v1320 = vpow.pop %v1319
      %v1321 = vmul.f32 %v1311, 1.442695
      %v1322 = vpow.pop %v1321
      %v1323 = vmul.f32 %v1312, 1.442695
      %v1324 = vpow.pop %v1323
      %v1325 = vmul.f32 %v1313, 1.442695
      %v1326 = vpow.pop %v1325
      %v1327 = vmul.f32 %v1314, 1.442695
      %v1328 = vpow.pop %v1327
      %v1329 = vmul.f32 %v1315, 1.442695
      %v1330 = vpow.pop %v1329
      %v1331 = vmul.f32 %v1316, 1.442695
      %v1332 = vpow.pop %v1331
      %1333 = vadd.xlane.f32.xlu0 %v1318
      %v1334 = vpop.xlane.xlu0 %1333
      %1335 = vadd.xlane.f32.xlu0 %v1320
      %v1336 = vpop.xlane.xlu0 %1335
      %1337 = vadd.xlane.f32.xlu0 %v1322
      %v1338 = vpop.xlane.xlu0 %1337
      %1339 = vadd.xlane.f32.xlu0 %v1324
      %v1340 = vpop.xlane.xlu0 %1339
      %1341 = vadd.xlane.f32.xlu0 %v1326
      %v1342 = vpop.xlane.xlu0 %1341
      %1343 = vadd.xlane.f32.xlu0 %v1328
      %v1344 = vpop.xlane.xlu0 %1343
      %1345 = vadd.xlane.f32.xlu0 %v1330
      %v1346 = vpop.xlane.xlu0 %1345
      %1347 = vadd.xlane.f32.xlu0 %v1332
      %v1348 = vpop.xlane.xlu0 %1347
      %v1349 = vrcp.pop %v1334
      %v1350 = vrcp.pop %v1336
      %v1351 = vrcp.pop %v1338
      %v1352 = vrcp.pop %v1340
      %v1353 = vrcp.pop %v1342
      %v1354 = vrcp.pop %v1344
      %v1355 = vrcp.pop %v1346
      %v1356 = vrcp.pop %v1348
      %v1357 = vmul.f32 %v1318, %v1349
      %v1358 = vmul.f32 %v1320, %v1350
      %v1359 = vmul.f32 %v1322, %v1351
      %v1360 = vmul.f32 %v1324, %v1352
      %v1361 = vmul.f32 %v1326, %v1353
      %v1362 = vmul.f32 %v1328, %v1354
      %v1363 = vmul.f32 %v1330, %v1355
      %v1364 = vmul.f32 %v1332, %v1356
      %v1365 = vpack.c.bf16 %v1358, %v1357
      %v1366 = vpack.c.bf16 %v1360, %v1359
      %v1367 = vpack.c.bf16 %v1362, %v1361
      %v1368 = vpack.c.bf16 %v1364, %v1363
      %1369 = vst [vmem:[#allocation2 + $0x8] sm:$0xff] %v1365
      %1370 = vst [vmem:[#allocation2 + $0x18] sm:$0xff] %v1366
      %1371 = vst [vmem:[#allocation2 + $0x28] sm:$0xff] %v1367
      %1372 = vst [vmem:[#allocation2 + $0x38] sm:$0xff] %v1368
      %v1373 = vld [vmem:[#allocation2] sm:$0xff]
      %v1374 = vld [vmem:[#allocation2 + $0x8] sm:$0xff]
      %v1375 = vld [vmem:[#allocation2 + $0x10] sm:$0xff]
      %v1376 = vld [vmem:[#allocation2 + $0x18] sm:$0xff]
      %v1377 = vld [vmem:[#allocation2 + $0x20] sm:$0xff]
      %v1378 = vld [vmem:[#allocation2 + $0x28] sm:$0xff]
      %v1379 = vld [vmem:[#allocation2 + $0x30] sm:$0xff]
      %v1380 = vld [vmem:[#allocation2 + $0x38] sm:$0xff]
      %v1381 = vld [vmem:[%s472] sm:$0xf]
      %v1382 = vld [vmem:[%s472 + $0x4] sm:$0xf]
      %v1383 = vld [vmem:[%s472 + $0x8] sm:$0xf]
      %v1384 = vld [vmem:[%s472 + $0xc] sm:$0xf]
      %v1385 = vld [vmem:[%s472 + $0x10] sm:$0xf]
      %v1386 = vld [vmem:[%s472 + $0x14] sm:$0xf]
      %v1387 = vld [vmem:[%s472 + $0x18] sm:$0xf]
      %v1388 = vld [vmem:[%s472 + $0x1c] sm:$0xf]
      %v1389 = vld [vmem:[%s472 + $0x20] sm:$0xf]
      %v1390 = vld [vmem:[%s472 + $0x24] sm:$0xf]
      %v1391 = vld [vmem:[%s472 + $0x28] sm:$0xf]
      %v1392 = vld [vmem:[%s472 + $0x2c] sm:$0xf]
      %v1393 = vld [vmem:[%s472 + $0x30] sm:$0xf]
      %v1394 = vld [vmem:[%s472 + $0x34] sm:$0xf]
      %v1395 = vld [vmem:[%s472 + $0x38] sm:$0xf]
      %v1396 = vld [vmem:[%s472 + $0x3c] sm:$0xf]
      %v1397 = vld [vmem:[%s472 + $0x40] sm:$0xf]
      %v1398 = vld [vmem:[%s472 + $0x44] sm:$0xf]
      %v1399 = vld [vmem:[%s472 + $0x48] sm:$0xf]
      %v1400 = vld [vmem:[%s472 + $0x4c] sm:$0xf]
      %v1401 = vld [vmem:[%s472 + $0x50] sm:$0xf]
      %v1402 = vld [vmem:[%s472 + $0x54] sm:$0xf]
      %v1403 = vld [vmem:[%s472 + $0x58] sm:$0xf]
      %v1404 = vld [vmem:[%s472 + $0x5c] sm:$0xf]
      %v1405 = vld [vmem:[%s472 + $0x60] sm:$0xf]
      %v1406 = vld [vmem:[%s472 + $0x64] sm:$0xf]
      %v1407 = vld [vmem:[%s472 + $0x68] sm:$0xf]
      %v1408 = vld [vmem:[%s472 + $0x6c] sm:$0xf]
      %v1409 = vld [vmem:[%s472 + $0x70] sm:$0xf]
      %v1410 = vld [vmem:[%s472 + $0x74] sm:$0xf]
      %v1411 = vld [vmem:[%s472 + $0x78] sm:$0xf]
      %v1412 = vld [vmem:[%s472 + $0x7c] sm:$0xf]
      %v1445 = vunpack.c.l.b16 %v1381
      %v1446 = vunpack.c.l.b16 %v1382
      %v1447 = vunpack.c.l.b16 %v1383
      %v1448 = vunpack.c.l.b16 %v1384
      %v1449 = vunpack.c.l.b16 %v1385
      %v1450 = vunpack.c.l.b16 %v1386
      %v1451 = vunpack.c.l.b16 %v1387
      %v1452 = vunpack.c.l.b16 %v1388
      %v1453 = vunpack.c.l.b16 %v1389
      %v1454 = vunpack.c.l.b16 %v1390
      %v1455 = vunpack.c.l.b16 %v1391
      %v1456 = vunpack.c.l.b16 %v1392
      %v1457 = vunpack.c.l.b16 %v1393
      %v1458 = vunpack.c.l.b16 %v1394
      %v1459 = vunpack.c.l.b16 %v1395
      %v1460 = vunpack.c.l.b16 %v1396
      %v1461 = vunpack.c.l.b16 %v1397
      %v1462 = vunpack.c.l.b16 %v1398
      %v1463 = vunpack.c.l.b16 %v1399
      %v1464 = vunpack.c.l.b16 %v1400
      %v1465 = vunpack.c.l.b16 %v1401
      %v1466 = vunpack.c.l.b16 %v1402
      %v1467 = vunpack.c.l.b16 %v1403
      %v1468 = vunpack.c.l.b16 %v1404
      %v1469 = vunpack.c.l.b16 %v1405
      %v1470 = vunpack.c.l.b16 %v1406
      %v1471 = vunpack.c.l.b16 %v1407
      %v1472 = vunpack.c.l.b16 %v1408
      %v1473 = vunpack.c.l.b16 %v1409
      %v1474 = vunpack.c.l.b16 %v1410
      %v1475 = vunpack.c.l.b16 %v1411
      %v1476 = vunpack.c.l.b16 %v1412
      %v1477 = vpack.c.b16 %v1446, %v1445
      %v1478 = vpack.c.b16 %v1448, %v1447
      %v1479 = vpack.c.b16 %v1450, %v1449
      %v1480 = vpack.c.b16 %v1452, %v1451
      %v1481 = vpack.c.b16 %v1454, %v1453
      %v1482 = vpack.c.b16 %v1456, %v1455
      %v1483 = vpack.c.b16 %v1458, %v1457
      %v1484 = vpack.c.b16 %v1460, %v1459
      %v1485 = vpack.c.b16 %v1462, %v1461
      %v1486 = vpack.c.b16 %v1464, %v1463
      %v1487 = vpack.c.b16 %v1466, %v1465
      %v1488 = vpack.c.b16 %v1468, %v1467
      %v1489 = vpack.c.b16 %v1470, %v1469
      %v1490 = vpack.c.b16 %v1472, %v1471
      %v1491 = vpack.c.b16 %v1474, %v1473
      %v1492 = vpack.c.b16 %v1476, %v1475
      %1509 = vmatprep.subr.bf16.mxu0 0
      %1510 = vmatpush1.bf16.msra.mxu0 %v1477
      %1511 = vmatprep.subr.bf16.mxu0 0
      %1512 = vmatpush1.bf16.msra.mxu0 %v1478
      %1513 = vmatprep.subr.bf16.mxu0 0
      %1514 = vmatpush1.bf16.msra.mxu0 %v1479
      %1515 = vmatprep.subr.bf16.mxu0 0
      %1516 = vmatpush1.bf16.msra.mxu0 %v1480
      %1517 = vmatprep.subr.bf16.mxu0 0
      %1518 = vmatpush1.bf16.msra.mxu0 %v1481
      %1519 = vmatprep.subr.bf16.mxu0 0
      %1520 = vmatpush1.bf16.msra.mxu0 %v1482
      %1521 = vmatprep.subr.bf16.mxu0 0
      %1522 = vmatpush1.bf16.msra.mxu0 %v1483
      %1523 = vmatprep.subr.bf16.mxu0 0
      %1524 = vmatpush1.bf16.msra.mxu0 %v1484
      %1525 = vmatprep.subr.bf16.mxu0 0
      %1526 = vmatpush1.bf16.msra.mxu0 %v1485
      %1527 = vmatprep.subr.bf16.mxu0 0
      %1528 = vmatpush1.bf16.msra.mxu0 %v1486
      %1529 = vmatprep.subr.bf16.mxu0 0
      %1530 = vmatpush1.bf16.msra.mxu0 %v1487
      %1531 = vmatprep.subr.bf16.mxu0 0
      %1532 = vmatpush1.bf16.msra.mxu0 %v1488
      %1533 = vmatprep.subr.bf16.mxu0 0
      %1534 = vmatpush1.bf16.msra.mxu0 %v1489
      %1535 = vmatprep.subr.bf16.mxu0 0
      %1536 = vmatpush1.bf16.msra.mxu0 %v1490
      %1537 = vmatprep.subr.bf16.mxu0 0
      %1538 = vmatpush1.bf16.msra.mxu0 %v1491
      %1539 = vmatprep.subr.bf16.mxu0 0
      %1540 = vmatpush1.bf16.msra.mxu0 %v1492
      %1541 = vmatprep.mubr.bf16.mxu0 %v1374
      %1542 = vmatmul.mubr.bf16.gmra.mrb[0].mxu0 %v1373
      %v1543 = vpop.f32.mrb[0].mxu0
      %v1544 = vadd.f32 %v484, %v1543
      %v1545 = vpop.f32.mrb[0].mxu0
      %v1546 = vpop.f32.mrb[0].mxu0
      %v1547 = vadd.f32 %v485, %v1546
      %v1548 = vpop.f32.mrb[0].mxu0
      %1549 = vmatprep.mubr.bf16.mxu0 %v1376
      %1550 = vmatmul.mubr.bf16.gmra.mrb[0].mxu0 %v1375
      %v1551 = vpop.f32.mrb[0].mxu0
      %v1552 = vadd.f32 %v486, %v1551
      %v1553 = vpop.f32.mrb[0].mxu0
      %v1554 = vpop.f32.mrb[0].mxu0
      %v1555 = vadd.f32 %v487, %v1554
      %v1556 = vpop.f32.mrb[0].mxu0
      %1557 = vmatprep.mubr.bf16.mxu0 %v1378
      %1558 = vmatmul.mubr.bf16.gmra.mrb[0].mxu0 %v1377
      %v1559 = vpop.f32.mrb[0].mxu0
      %v1560 = vadd.f32 %v488, %v1559
      %v1561 = vpop.f32.mrb[0].mxu0
      %v1562 = vpop.f32.mrb[0].mxu0
      %v1563 = vadd.f32 %v489, %v1562
      %v1564 = vpop.f32.mrb[0].mxu0
      %1565 = vmatprep.mubr.bf16.mxu0 %v1380
      %1566 = vmatmul.mubr.bf16.gmra.mrb[0].mxu0 %v1379
      %v1567 = vpop.f32.mrb[0].mxu0
      %v1568 = vadd.f32 %v490, %v1567
      %v1569 = vpop.f32.mrb[0].mxu0
      %v1570 = vpop.f32.mrb[0].mxu0
      %v1571 = vadd.f32 %v491, %v1570
      %v1572 = vpop.f32.mrb[0].mxu0
      %1573 = vdwg.mxu0
      %v1574 = vmul.f32 %v1544, %v1544
      %v1575 = vmul.f32 %v1547, %v1547
      %v1576 = vmul.f32 %v1552, %v1552
      %v1577 = vmul.f32 %v1555, %v1555
      %v1578 = vmul.f32 %v1560, %v1560
      %v1579 = vmul.f32 %v1563, %v1563
      %v1580 = vmul.f32 %v1568, %v1568
      %v1581 = vmul.f32 %v1571, %v1571
      %v1582 = vsel %vm500, %v1574, 0.0
      %1583 = vadd.xlane.f32.xlu0 %v1582
      %v1584 = vpop.xlane.xlu0 %1583
      %v1585 = vsel %vm500, %v1575, 0.0
      %1586 = vadd.xlane.f32.xlu0 %v1585
      %v1587 = vpop.xlane.xlu0 %1586
      %v1588 = vsel %vm500, %v1576, 0.0
      %1589 = vadd.xlane.f32.xlu0 %v1588
      %v1590 = vpop.xlane.xlu0 %1589
      %v1591 = vsel %vm500, %v1577, 0.0
      %1592 = vadd.xlane.f32.xlu0 %v1591
      %v1593 = vpop.xlane.xlu0 %1592
      %v1594 = vsel %vm500, %v1578, 0.0
      %1595 = vadd.xlane.f32.xlu0 %v1594
      %v1596 = vpop.xlane.xlu0 %1595
      %v1597 = vsel %vm500, %v1579, 0.0
      %1598 = vadd.xlane.f32.xlu0 %v1597
      %v1599 = vpop.xlane.xlu0 %1598
      %v1600 = vsel %vm500, %v1580, 0.0
      %1601 = vadd.xlane.f32.xlu0 %v1600
      %v1602 = vpop.xlane.xlu0 %1601
      %v1603 = vsel %vm500, %v1581, 0.0
      %1604 = vadd.xlane.f32.xlu0 %v1603
      %v1605 = vpop.xlane.xlu0 %1604
      %v1606 = vrsqrt.pop %v1584
      %v1607 = vmul.f32 %v1584, %v1606
      %vm1608 = vcmp.eq.f32.partialorder %v1584, inf
      %v1609 = vsel %vm1608, %v1584, %v1607
      %vm1610 = vcmp.eq.f32.partialorder %v1584, 0.0
      %v1611 = vand.u32 %v1584, 2147483648
      %v1612 = vsel %vm1610, %v1611, %v1609
      %v1613 = vrsqrt.pop %v1587
      %v1614 = vmul.f32 %v1587, %v1613
      %vm1615 = vcmp.eq.f32.partialorder %v1587, inf
      %v1616 = vsel %vm1615, %v1587, %v1614
      %vm1617 = vcmp.eq.f32.partialorder %v1587, 0.0
      %v1618 = vand.u32 %v1587, 2147483648
      %v1619 = vsel %vm1617, %v1618, %v1616
      %v1620 = vrsqrt.pop %v1590
      %v1621 = vmul.f32 %v1590, %v1620
      %vm1622 = vcmp.eq.f32.partialorder %v1590, inf
      %v1623 = vsel %vm1622, %v1590, %v1621
      %vm1624 = vcmp.eq.f32.partialorder %v1590, 0.0
      %v1625 = vand.u32 %v1590, 2147483648
      %v1626 = vsel %vm1624, %v1625, %v1623
      %v1627 = vrsqrt.pop %v1593
      %v1628 = vmul.f32 %v1593, %v1627
      %vm1629 = vcmp.eq.f32.partialorder %v1593, inf
      %v1630 = vsel %vm1629, %v1593, %v1628
      %vm1631 = vcmp.eq.f32.partialorder %v1593, 0.0
      %v1632 = vand.u32 %v1593, 2147483648
      %v1633 = vsel %vm1631, %v1632, %v1630
      %v1634 = vrsqrt.pop %v1596
      %v1635 = vmul.f32 %v1596, %v1634
      %vm1636 = vcmp.eq.f32.partialorder %v1596, inf
      %v1637 = vsel %vm1636, %v1596, %v1635
      %vm1638 = vcmp.eq.f32.partialorder %v1596, 0.0
      %v1639 = vand.u32 %v1596, 2147483648
      %v1640 = vsel %vm1638, %v1639, %v1637
      %v1641 = vrsqrt.pop %v1599
      %v1642 = vmul.f32 %v1599, %v1641
      %vm1643 = vcmp.eq.f32.partialorder %v1599, inf
      %v1644 = vsel %vm1643, %v1599, %v1642
      %vm1645 = vcmp.eq.f32.partialorder %v1599, 0.0
      %v1646 = vand.u32 %v1599, 2147483648
      %v1647 = vsel %vm1645, %v1646, %v1644
      %v1648 = vrsqrt.pop %v1602
      %v1649 = vmul.f32 %v1602, %v1648
      %vm1650 = vcmp.eq.f32.partialorder %v1602, inf
      %v1651 = vsel %vm1650, %v1602, %v1649
      %vm1652 = vcmp.eq.f32.partialorder %v1602, 0.0
      %v1653 = vand.u32 %v1602, 2147483648
      %v1654 = vsel %vm1652, %v1653, %v1651
      %v1655 = vrsqrt.pop %v1605
      %v1656 = vmul.f32 %v1605, %v1655
      %vm1657 = vcmp.eq.f32.partialorder %v1605, inf
      %v1658 = vsel %vm1657, %v1605, %v1656
      %vm1659 = vcmp.eq.f32.partialorder %v1605, 0.0
      %v1660 = vand.u32 %v1605, 2147483648
      %v1661 = vsel %vm1659, %v1660, %v1658
      %v1662 = vmax.f32 %v1612, 1e-12
      %v1663 = vmax.f32 %v1619, 1e-12
      %v1664 = vmax.f32 %v1626, 1e-12
      %v1665 = vmax.f32 %v1633, 1e-12
      %v1666 = vmax.f32 %v1640, 1e-12
      %v1667 = vmax.f32 %v1647, 1e-12
      %v1668 = vmax.f32 %v1654, 1e-12
      %v1669 = vmax.f32 %v1661, 1e-12
      %v1670 = vrcp.pop %v1662
      %v1671 = vmul.f32 %v1544, %v1670
      %v1672 = vrcp.pop %v1663
      %v1673 = vmul.f32 %v1547, %v1672
      %v1674 = vrcp.pop %v1664
      %v1675 = vmul.f32 %v1552, %v1674
      %v1676 = vrcp.pop %v1665
      %v1677 = vmul.f32 %v1555, %v1676
      %v1678 = vrcp.pop %v1666
      %v1679 = vmul.f32 %v1560, %v1678
      %v1680 = vrcp.pop %v1667
      %v1681 = vmul.f32 %v1563, %v1680
      %v1682 = vrcp.pop %v1668
      %v1683 = vmul.f32 %v1568, %v1682
      %v1684 = vrcp.pop %v1669
      %v1685 = vmul.f32 %v1571, %v1684
      %v1686 = vmul.f32 %v1671, 2.828427
      %v1687 = vmul.f32 %v1673, 2.828427
      %v1688 = vmul.f32 %v1675, 2.828427
      %v1689 = vmul.f32 %v1677, 2.828427
      %v1690 = vmul.f32 %v1679, 2.828427
      %v1691 = vmul.f32 %v1681, 2.828427
      %v1692 = vmul.f32 %v1683, 2.828427
      %v1693 = vmul.f32 %v1685, 2.828427
      %v1694 = vld [vmem:[%s6] sm:$0x1]
      %v1696 = vlaneseq
      %v1697 = vshrl.u32 %v1696, 7
      %v1698 = vsub.s32 0, %v1697
      %v1699 = vrot.slane %v1694, %v1698
      %v1701 = vmul.f32 %v1686, %v1699
      %v1702 = vmul.f32 %v1687, %v1699
      %v1703 = vmul.f32 %v1688, %v1699
      %v1704 = vmul.f32 %v1689, %v1699
      %v1705 = vmul.f32 %v1690, %v1699
      %v1706 = vmul.f32 %v1691, %v1699
      %v1707 = vmul.f32 %v1692, %v1699
      %v1708 = vmul.f32 %v1693, %v1699
      %v1709 = vpack.c.bf16 %v1702, %v1701
      %v1710 = vpack.c.bf16 %v1704, %v1703
      %v1711 = vpack.c.bf16 %v1706, %v1705
      %v1712 = vpack.c.bf16 %v1708, %v1707
      %v1713 = vld [vmem:[%s7] sm:$0xf]
      %v1714 = vld [vmem:[%s8] sm:$0x1]
      %v1716 = vlaneseq
      %v1717 = vshrl.u32 %v1716, 7
      %v1718 = vsub.s32 0, %v1717
      %v1719 = vrot.slane %v1714, %v1718
      %v1722 = vsel %vm500, %v1709, 0
      %v1725 = vsel %vm500, %v1710, 0
      %v1728 = vsel %vm500, %v1711, 0
      %v1731 = vsel %vm500, %v1712, 0
      %v1734 = vsel %vm645, %v1713, 0
      %1736 = vmatprep.subr.bf16.mxu0 0
      %1737 = vmatpush1.bf16.msra.mxu0 %v1734
      %1738 = vmatprep.subr.bf16.mxu0 0
      %1739 = vmatpush1.bf16.msra.mxu0 0
      %1740 = vmatprep.subr.bf16.mxu0 0
      %1741 = vmatpush1.bf16.msra.mxu0 0
      %1742 = vmatprep.subr.bf16.mxu0 0
      %1743 = vmatpush1.bf16.msra.mxu0 0
      %1744 = vmatprep.subr.bf16.mxu0 0
      %1745 = vmatpush1.bf16.msra.mxu0 0
      %1746 = vmatprep.subr.bf16.mxu0 0
      %1747 = vmatpush1.bf16.msra.mxu0 0
      %1748 = vmatprep.subr.bf16.mxu0 0
      %1749 = vmatpush1.bf16.msra.mxu0 0
      %1750 = vmatprep.subr.bf16.mxu0 0
      %1751 = vmatpush1.bf16.msra.mxu0 0
      %1752 = vmatprep.subr.bf16.mxu0 0
      %1753 = vmatpush1.bf16.msra.mxu0 0
      %1754 = vmatprep.subr.bf16.mxu0 0
      %1755 = vmatpush1.bf16.msra.mxu0 0
      %1756 = vmatprep.subr.bf16.mxu0 0
      %1757 = vmatpush1.bf16.msra.mxu0 0
      %1758 = vmatprep.subr.bf16.mxu0 0
      %1759 = vmatpush1.bf16.msra.mxu0 0
      %1760 = vmatprep.subr.bf16.mxu0 0
      %1761 = vmatpush1.bf16.msra.mxu0 0
      %1762 = vmatprep.subr.bf16.mxu0 0
      %1763 = vmatpush1.bf16.msra.mxu0 0
      %1764 = vmatprep.subr.bf16.mxu0 0
      %1765 = vmatpush1.bf16.msra.mxu0 0
      %1766 = vmatprep.subr.bf16.mxu0 0
      %1767 = vmatpush1.bf16.msra.mxu0 0
      %1768 = vmatprep.mubr.bf16.mxu0 0
      %1769 = vmatmul.mubr.bf16.gmra.mrb[0].mxu0 %v1722
      %v1770 = vpop.f32.mrb[0].mxu0
      %v1771 = vadd.f32 %v1719, %v1770
      %v1772 = vpop.f32.mrb[0].mxu0
      %v1773 = vpop.f32.mrb[0].mxu0
      %v1774 = vadd.f32 %v1719, %v1773
      %v1775 = vpop.f32.mrb[0].mxu0
      %1776 = vmatprep.mubr.bf16.mxu0 0
      %1777 = vmatmul.mubr.bf16.gmra.mrb[0].mxu0 %v1725
      %v1778 = vpop.f32.mrb[0].mxu0
      %v1779 = vadd.f32 %v1719, %v1778
      %v1780 = vpop.f32.mrb[0].mxu0
      %v1781 = vpop.f32.mrb[0].mxu0
      %v1782 = vadd.f32 %v1719, %v1781
      %v1783 = vpop.f32.mrb[0].mxu0
      %1784 = vmatprep.mubr.bf16.mxu0 0
      %1785 = vmatmul.mubr.bf16.gmra.mrb[0].mxu0 %v1728
      %v1786 = vpop.f32.mrb[0].mxu0
      %v1787 = vadd.f32 %v1719, %v1786
      %v1788 = vpop.f32.mrb[0].mxu0
      %v1789 = vpop.f32.mrb[0].mxu0
      %v1790 = vadd.f32 %v1719, %v1789
      %v1791 = vpop.f32.mrb[0].mxu0
      %1792 = vmatprep.mubr.bf16.mxu0 0
      %1793 = vmatmul.mubr.bf16.gmra.mrb[0].mxu0 %v1731
      %v1794 = vpop.f32.mrb[0].mxu0
      %v1795 = vadd.f32 %v1719, %v1794
      %v1796 = vpop.f32.mrb[0].mxu0
      %v1797 = vpop.f32.mrb[0].mxu0
      %v1798 = vadd.f32 %v1719, %v1797
      %v1799 = vpop.f32.mrb[0].mxu0
      %1800 = vdwg.mxu0
      %v1801 = vmul.f32 %v1771, %v1771
      %v1802 = vmul.f32 %v1774, %v1774
      %v1803 = vmul.f32 %v1779, %v1779
      %v1804 = vmul.f32 %v1782, %v1782
      %v1805 = vmul.f32 %v1787, %v1787
      %v1806 = vmul.f32 %v1790, %v1790
      %v1807 = vmul.f32 %v1795, %v1795
      %v1808 = vmul.f32 %v1798, %v1798
      %v1809 = vmul.f32 %v1771, %v1801
      %v1810 = vmul.f32 %v1774, %v1802
      %v1811 = vmul.f32 %v1779, %v1803
      %v1812 = vmul.f32 %v1782, %v1804
      %v1813 = vmul.f32 %v1787, %v1805
      %v1814 = vmul.f32 %v1790, %v1806
      %v1815 = vmul.f32 %v1795, %v1807
      %v1816 = vmul.f32 %v1798, %v1808
      %v1817 = vmul.f32 %v1809, 0.044715
      %v1818 = vmul.f32 %v1810, 0.044715
      %v1819 = vmul.f32 %v1811, 0.044715
      %v1820 = vmul.f32 %v1812, 0.044715
      %v1821 = vmul.f32 %v1813, 0.044715
      %v1822 = vmul.f32 %v1814, 0.044715
      %v1823 = vmul.f32 %v1815, 0.044715
      %v1824 = vmul.f32 %v1816, 0.044715
      %v1825 = vadd.f32 %v1771, %v1817
      %v1826 = vadd.f32 %v1774, %v1818
      %v1827 = vadd.f32 %v1779, %v1819
      %v1828 = vadd.f32 %v1782, %v1820
      %v1829 = vadd.f32 %v1787, %v1821
      %v1830 = vadd.f32 %v1790, %v1822
      %v1831 = vadd.f32 %v1795, %v1823
      %v1832 = vadd.f32 %v1798, %v1824
      %v1833 = vmul.f32 %v1825, 0.7978846
      %v1834 = vmul.f32 %v1826, 0.7978846
      %v1835 = vmul.f32 %v1827, 0.7978846
      %v1836 = vmul.f32 %v1828, 0.7978846
      %v1837 = vmul.f32 %v1829, 0.7978846
      %v1838 = vmul.f32 %v1830, 0.7978846
      %v1839 = vmul.f32 %v1831, 0.7978846
      %v1840 = vmul.f32 %v1832, 0.7978846
      %v1841 = vtanh.pop %v1833
      %v1842 = vtanh.pop %v1834
      %v1843 = vtanh.pop %v1835
      %v1844 = vtanh.pop %v1836
      %v1845 = vtanh.pop %v1837
      %v1846 = vtanh.pop %v1838
      %v1847 = vtanh.pop %v1839
      %v1848 = vtanh.pop %v1840
      %v1849 = vadd.f32 %v1841, 1.0
      %v1850 = vadd.f32 %v1842, 1.0
      %v1851 = vadd.f32 %v1843, 1.0
      %v1852 = vadd.f32 %v1844, 1.0
      %v1853 = vadd.f32 %v1845, 1.0
      %v1854 = vadd.f32 %v1846, 1.0
      %v1855 = vadd.f32 %v1847, 1.0
      %v1856 = vadd.f32 %v1848, 1.0
      %v1857 = vmul.f32 %v1849, 0.5
      %v1858 = vmul.f32 %v1850, 0.5
      %v1859 = vmul.f32 %v1851, 0.5
      %v1860 = vmul.f32 %v1852, 0.5
      %v1861 = vmul.f32 %v1853, 0.5
      %v1862 = vmul.f32 %v1854, 0.5
      %v1863 = vmul.f32 %v1855, 0.5
      %v1864 = vmul.f32 %v1856, 0.5
      %v1865 = vmul.f32 %v1771, %v1857
      %v1866 = vmul.f32 %v1774, %v1858
      %v1867 = vmul.f32 %v1779, %v1859
      %v1868 = vmul.f32 %v1782, %v1860
      %v1869 = vmul.f32 %v1787, %v1861
      %v1870 = vmul.f32 %v1790, %v1862
      %v1871 = vmul.f32 %v1795, %v1863
      %v1872 = vmul.f32 %v1798, %v1864
      %v1873 = vpack.c.bf16 %v1866, %v1865
      %v1874 = vpack.c.bf16 %v1868, %v1867
      %v1875 = vpack.c.bf16 %v1870, %v1869
      %v1876 = vpack.c.bf16 %v1872, %v1871
      %v1877 = vld [vmem:[%s9] sm:$0xf]
      %v1878 = vld [vmem:[%s9 + $0x4] sm:$0xf]
      %v1879 = vld [vmem:[%s9 + $0x8] sm:$0xf]
      %v1880 = vld [vmem:[%s9 + $0xc] sm:$0xf]
      %v1881 = vld [vmem:[%s10] sm:$0x1]
      %v1883 = vlaneseq
      %v1884 = vshrl.u32 %v1883, 7
      %v1885 = vsub.s32 0, %v1884
      %v1886 = vrot.slane %v1881, %v1885
      %v1892 = vunpack.c.l.b16 %v1877
      %v1893 = vunpack.c.l.b16 %v1878
      %v1894 = vunpack.c.l.b16 %v1879
      %v1895 = vunpack.c.l.b16 %v1880
      %v1896 = vpack.c.b16 %v1893, %v1892
      %v1897 = vpack.c.b16 %v1895, %v1894
      %vm1900 = vcmask 261120
      %v1902 = vsel %vm1900, %v1873, 0
      %v1905 = vsel %vm1900, %v1874, 0
      %v1908 = vsel %vm1900, %v1875, 0
      %v1911 = vsel %vm1900, %v1876, 0
      %1913 = vmatprep.subr.bf16.mxu0 0
      %1914 = vmatpush1.bf16.msra.mxu0 %v1896
      %1915 = vmatprep.subr.bf16.mxu0 0
      %1916 = vmatpush1.bf16.msra.mxu0 %v1897
      %1917 = vmatprep.subr.bf16.mxu0 0
      %1918 = vmatpush1.bf16.msra.mxu0 0
      %1919 = vmatprep.subr.bf16.mxu0 0
      %1920 = vmatpush1.bf16.msra.mxu0 0
      %1921 = vmatprep.subr.bf16.mxu0 0
      %1922 = vmatpush1.bf16.msra.mxu0 0
      %1923 = vmatprep.subr.bf16.mxu0 0
      %1924 = vmatpush1.bf16.msra.mxu0 0
      %1925 = vmatprep.subr.bf16.mxu0 0
      %1926 = vmatpush1.bf16.msra.mxu0 0
      %1927 = vmatprep.subr.bf16.mxu0 0
      %1928 = vmatpush1.bf16.msra.mxu0 0
      %1929 = vmatprep.subr.bf16.mxu0 0
      %1930 = vmatpush1.bf16.msra.mxu0 0
      %1931 = vmatprep.subr.bf16.mxu0 0
      %1932 = vmatpush1.bf16.msra.mxu0 0
      %1933 = vmatprep.subr.bf16.mxu0 0
      %1934 = vmatpush1.bf16.msra.mxu0 0
      %1935 = vmatprep.subr.bf16.mxu0 0
      %1936 = vmatpush1.bf16.msra.mxu0 0
      %1937 = vmatprep.subr.bf16.mxu0 0
      %1938 = vmatpush1.bf16.msra.mxu0 0
      %1939 = vmatprep.subr.bf16.mxu0 0
      %1940 = vmatpush1.bf16.msra.mxu0 0
      %1941 = vmatprep.subr.bf16.mxu0 0
      %1942 = vmatpush1.bf16.msra.mxu0 0
      %1943 = vmatprep.subr.bf16.mxu0 0
      %1944 = vmatpush1.bf16.msra.mxu0 0
      %1945 = vmatprep.mubr.bf16.mxu0 0
      %1946 = vmatmul.mubr.bf16.gmra.mrb[0].mxu0 %v1902
      %v1947 = vpop.f32.mrb[0].mxu0
      %v1948 = vadd.f32 %v1886, %v1947
      %v1949 = vpop.f32.mrb[0].mxu0
      %v1950 = vpop.f32.mrb[0].mxu0
      %v1951 = vadd.f32 %v1886, %v1950
      %v1952 = vpop.f32.mrb[0].mxu0
      %1953 = vmatprep.mubr.bf16.mxu0 0
      %1954 = vmatmul.mubr.bf16.gmra.mrb[0].mxu0 %v1905
      %v1955 = vpop.f32.mrb[0].mxu0
      %v1956 = vadd.f32 %v1886, %v1955
      %v1957 = vpop.f32.mrb[0].mxu0
      %v1958 = vpop.f32.mrb[0].mxu0
      %v1959 = vadd.f32 %v1886, %v1958
      %v1960 = vpop.f32.mrb[0].mxu0
      %1961 = vmatprep.mubr.bf16.mxu0 0
      %1962 = vmatmul.mubr.bf16.gmra.mrb[0].mxu0 %v1908
      %v1963 = vpop.f32.mrb[0].mxu0
      %v1964 = vadd.f32 %v1886, %v1963
      %v1965 = vpop.f32.mrb[0].mxu0
      %v1966 = vpop.f32.mrb[0].mxu0
      %v1967 = vadd.f32 %v1886, %v1966
      %v1968 = vpop.f32.mrb[0].mxu0
      %1969 = vmatprep.mubr.bf16.mxu0 0
      %1970 = vmatmul.mubr.bf16.gmra.mrb[0].mxu0 %v1911
      %v1971 = vpop.f32.mrb[0].mxu0
      %v1972 = vadd.f32 %v1886, %v1971
      %v1973 = vpop.f32.mrb[0].mxu0
      %v1974 = vpop.f32.mrb[0].mxu0
      %v1975 = vadd.f32 %v1886, %v1974
      %v1976 = vpop.f32.mrb[0].mxu0
      %1977 = vdwg.mxu0
      %v1978 = vadd.f32 %v1948, %v1544
      %v1979 = vadd.f32 %v1951, %v1547
      %v1980 = vadd.f32 %v1956, %v1552
      %v1981 = vadd.f32 %v1959, %v1555
      %v1982 = vadd.f32 %v1964, %v1560
      %v1983 = vadd.f32 %v1967, %v1563
      %v1984 = vadd.f32 %v1972, %v1568
      %v1985 = vadd.f32 %v1975, %v1571
      %1986 = vst.msk [vmem:[%s481] sm:$0xff] %vm500, %v1978
      %1987 = vst.msk [vmem:[%s481 + $0x8] sm:$0xff] %vm500, %v1979
      %1988 = vst.msk [vmem:[%s481 + $0x10] sm:$0xff] %vm500, %v1980
      %1989 = vst.msk [vmem:[%s481 + $0x18] sm:$0xff] %vm500, %v1981
      %1990 = vst.msk [vmem:[%s481 + $0x20] sm:$0xff] %vm500, %v1982
      %1991 = vst.msk [vmem:[%s481 + $0x28] sm:$0xff] %vm500, %v1983
      %1992 = vst.msk [vmem:[%s481 + $0x30] sm:$0xff] %vm500, %v1984
      %1993 = vst.msk [vmem:[%s481 + $0x38] sm:$0xff] %vm500, %v1985
      %s1994 = smul.u32 8, %s27
      %p1995 = scmp.lt.s32.totalorder %s26, 1
      %s1996 = scalar_select %p1995, %s26, 1
      %p1997 = scmp.lt.s32.totalorder %s1994, 31
      %s1998 = scalar_select %p1997, %s1994, 31
      %s1999 = smul.addr %s1996, 32
      %s2000 = sadd.s32 %s1998, %s1999
      %s2001 = smul.addr %s2000, 8
      %s2002 = scalar_lea.vmem %s11, %s2001
      // Predicated region
      $region65: #{tpu_custom_call.1} parent=63 // pred_check
        %p2003 = pneg %p307
      $region66: #{tpu_custom_call.1} parent=63 // pred_check_branch
        %2005 = sbr.rel (%p2003) target = $region68
      $region67: #{tpu_custom_call.1} parent=63 // pred_region
        %s2006 = smul.u32 8, %s27
      $region68: #{tpu_custom_call.1} parent=63 // pred_fallthru
        _
    $region64: #{tpu_custom_call.1} parent=5 // pred_fallthru
      _
    %p2007 = scmp.le.s32.totalorder 2, %s17
    // Predicated region
    $region69: #{tpu_custom_call.1} parent=5 // pred_check
      %p2008 = pneg %p2007
    $region70: #{tpu_custom_call.1} parent=5 // pred_check_branch
      %2010 = sbr.rel (%p2008) target = $region72
    $region71: #{tpu_custom_call.1} parent=5 // pred_region
      %s2011 = ssub.s32 %s17, 2
      // Predicated region
      $region73: #{tpu_custom_call.1} parent=71 // pred_check
        %p2012 = pneg %p313
      $region74: #{tpu_custom_call.1} parent=71 // pred_check_branch
        %2014 = sbr.rel (%p2012) target = $region76
      $region75: #{tpu_custom_call.1} parent=71 // pred_region
        %s2015 = smul.u32 8, %s29
        %p2016 = scmp.lt.s32.totalorder %s28, 1
        %s2017 = scalar_select %p2016, %s28, 1
        %p2018 = scmp.lt.s32.totalorder %s2015, 31
        %s2019 = scalar_select %p2018, %s2015, 31
        %s2020 = smul.addr %s2017, 32
        %s2021 = sadd.s32 %s2019, %s2020
        %s2022 = smul.addr %s2021, 8
        %s2023 = scalar_lea.vmem %s11, %s2022
      $region76: #{tpu_custom_call.1} parent=71 // pred_fallthru
        _
    $region72: #{tpu_custom_call.1} parent=5 // pred_fallthru
      _
  $region6: #{tpu_custom_call.1} parent=0 // loop_footer
    %s21 = sadd.s32 1, %s17
  $region7: #{tpu_custom_call.1} parent=0 // loop_footer_branch
    %16 = sbr.rel target = $region3
  $region8: #{tpu_custom_call.1} parent=0 // loop_exit
    _

</llo_original>
